<compile_context>
chip_gen: v6e
topology: v6e:2x2x1
jax: 0.10.0
libtpu: 0.0.40
codegen_flags: <defaults>
</compile_context>

<pallas_src>
import functools

import jax
import jax.numpy as jnp
from jax.experimental import pallas as pl
from jax.experimental.pallas import tpu as pltpu


def _round_up(n: int, m: int) -> int:
    return ((n + m - 1) // m) * m


def _default_act_dtype():
    """bf16 activations on bf16-native VALU chips (v6e/v7x); f32 elsewhere (v5e)."""
    try:
        kind = jax.devices()[0].device_kind.lower()
    except Exception:
        kind = ""
    return jnp.bfloat16 if any(t in kind for t in ("v6", "v7", "7x")) else jnp.float32


def _fc_model_kernel(x_ref, w1_ref, wmid_ref, w5_ref, w6_ref, b_ref, o_ref):
    """One batch tile of the fused residual MLP.

    x_ref:    (tile, numFeats)   compute dtype (bf16)
    w1_ref:   (numFeats, 64)     compute dtype
    wmid_ref: (3, 64, 64)        compute dtype  (fc2, fc3, fc4)
    w5_ref:   (64, 32)           compute dtype
    w6_ref:   (32, outChs)       compute dtype
    b_ref:    (6, bias_w)        activation dtype (rows zero-padded)
    o_ref:    (tile, outChs)     float32
    """
    act_dtype = b_ref.dtype
    d1 = w1_ref.shape[1]        # 64
    dm = wmid_ref.shape[2]      # 64
    d5 = w5_ref.shape[1]        # 32
    d6 = o_ref.shape[1]         # outChs

    def linear(v, w, b):
        # MXU matmul with f32 accumulation; bias add / ReLU / residuals stay
        # in act_dtype (bf16 on v6e/v7x, f32 on v5e).
        y = jnp.dot(v.astype(w.dtype), w, preferred_element_type=jnp.float32)
        return y.astype(act_dtype) + b

    x = x_ref[...]
    h = jnp.maximum(linear(x, w1_ref[...], b_ref[0:1, 0:d1]), 0)        # fc1 + ReLU
    h = jnp.maximum(linear(h, wmid_ref[0], b_ref[1:2, 0:dm]), 0) + h    # fc2 + ReLU + res
    h = jnp.maximum(linear(h, wmid_ref[1], b_ref[2:3, 0:dm]), 0)        # fc3 + ReLU
    h = jnp.maximum(linear(h, wmid_ref[2], b_ref[3:4, 0:dm]), 0) + h    # fc4 + ReLU + res
    h = jnp.maximum(linear(h, w5_ref[...], b_ref[4:5, 0:d5]), 0)        # fc5 + ReLU
    # fc6: f32 epilogue (bias add + store); operands still bf16 on the MXU.
    y = (jnp.dot(h.astype(w6_ref.dtype), w6_ref[...],
                 preferred_element_type=jnp.float32)
         + b_ref[5:6, 0:d6].astype(jnp.float32))
    o_ref[...] = y.astype(o_ref.dtype)


def fc_model_forward(x, params, graph=None, *, tile_b=1024,
                     compute_dtype=jnp.bfloat16, act_dtype=None):
    """Fused FcModel forward.  `graph` mirrors the PyTorch signature and is
    unused (as in the reference module)."""
    del graph
    if act_dtype is None:
        act_dtype = _default_act_dtype()
    return _fc_model_forward(x, params, tile_b, compute_dtype, act_dtype)


@functools.partial(jax.jit, static_argnums=(2, 3, 4))
def _fc_model_forward(x, params, tile_b, compute_dtype, act_dtype):
    B, num_feats = x.shape
    out_chs = params["w6"].shape[1]

    # --- static tiling -----------------------------------------------------
    # Large batch tile (default 1024, sweep 512-2048); clamped for tiny demo
    # batches; multiple of 8 sublanes.
    tile = min(tile_b, _round_up(B, 8))
    tile = max(8, _round_up(tile, 8))
    b_pad = _round_up(B, tile)
    # v7x megacore: guarantee >= 2 grid steps whenever the batch allows it so
    # both TensorCores get work; costs at most one extra ~0.35us step on
    # single-TC chips (v5e/v6e).
    if b_pad // tile < 2 and tile > 8:
        tile = max(8, _round_up((tile + 1) // 2, 8))
        b_pad = _round_up(B, tile)
    grid = (b_pad // tile,)

    # --- operands ------------------------------------------------------------
    # Pad + cast x to the MXU operand dtype in one fused pass (halves the x
    # HBM read stream and removes the fc1 cast in-kernel).
    xp = x.astype(compute_dtype)
    if b_pad != B:
        xp = jnp.pad(xp, ((0, b_pad - B), (0, 0)))

    w1 = params["w1"].astype(compute_dtype)
    w_mid = jnp.stack(
        [params["w2"], params["w3"], params["w4"]]).astype(compute_dtype)   # (3,64,64)
    w5 = params["w5"].astype(compute_dtype)
    w6 = params["w6"].astype(compute_dtype)

    # Pack all six biases into one (6, bias_w) slab (rows zero-padded).
    bias_w = max(64, out_chs)
    b_rows = []
    for k in range(1, 7):
        b = params[f"b{k}"].reshape(-1)
        b_rows.append(jnp.pad(b, (0, bias_w - b.shape[0])))
    b_all = jnp.stack(b_rows).astype(act_dtype)

    def resident(shape):
        # Small constant block, fully VMEM resident: same block every step.
        return pl.BlockSpec(shape, lambda i, _n=len(shape): (0,) * _n)

    in_specs = [
        pl.BlockSpec((tile, num_feats), lambda i: (i, 0)),
        resident(w1.shape),
        resident(w_mid.shape),
        resident(w5.shape),
        resident(w6.shape),
        resident(b_all.shape),
    ]
    # Narrow (tile, outChs) output block: legal since outChs equals the full
    # array dim, and avoids the 16x padded-write HBM traffic.
    out_spec = pl.BlockSpec((tile, out_chs), lambda i: (i, 0))

    out = pl.pallas_call(
        _fc_model_kernel,
        out_shape=jax.ShapeDtypeStruct((b_pad, out_chs), jnp.float32),
        grid_spec=pltpu.PrefetchScalarGridSpec(
            num_scalar_prefetch=0,
            grid=grid,
            in_specs=in_specs,
            out_specs=out_spec,
        ),
        compiler_params=pltpu.CompilerParams(
            dimension_semantics=("parallel",),
            vmem_limit_bytes=32 * 1024 * 1024,
        ),
    )(xp, w1, w_mid, w5, w6, b_all)

    return out[:B]


def init_params(key, num_feats, out_chs):
    """Deterministic init matching the module shapes.

    Biases are zero (as in _initialize_weights); weights are a deterministic
    uniform draw.  Weights are stored transposed: [in_features, out_features].
    """
    dims = [(num_feats, 64), (64, 64), (64, 64), (64, 64), (64, 32), (32, out_chs)]
    params = {}
    keys = jax.random.split(key, len(dims))
    for idx, ((din, dout), k) in enumerate(zip(dims, keys), start=1):
        bound = 1.0 / jnp.sqrt(jnp.float32(din))
        params[f"w{idx}"] = jax.random.uniform(
            k, (din, dout), dtype=jnp.float32, minval=-bound, maxval=bound
        )
        params[f"b{idx}"] = jnp.zeros((1, dout), dtype=jnp.float32)
    return params


def fc_model_reference(x, params, compute_dtype=jnp.float32, act_dtype=jnp.float32):
    """Pure-JAX reference with the same residual wiring as the PyTorch FcModel:
    fc1->relu->(res) fc2->relu->+res -> fc3->relu->(res) fc4->relu->+res ->
    fc5->relu -> fc6."""

    def lin(v, w, b, out_dtype):
        y = jnp.dot(v.astype(compute_dtype), w.astype(compute_dtype),
                    preferred_element_type=jnp.float32)
        return y.astype(out_dtype) + b.reshape(1, -1).astype(out_dtype)

    h = jax.nn.relu(lin(x, params["w1"], params["b1"], act_dtype))
    h = jax.nn.relu(lin(h, params["w2"], params["b2"], act_dtype)) + h
    h = jax.nn.relu(lin(h, params["w3"], params["b3"], act_dtype))
    h = jax.nn.relu(lin(h, params["w4"], params["b4"], act_dtype)) + h
    h = jax.nn.relu(lin(h, params["w5"], params["b5"], act_dtype))
    return lin(h, params["w6"], params["b6"], jnp.float32)


if __name__ == "__main__":
    num_feats = 32
    out_chs = 8
    batch = 500        # non-multiple of the tile: exercises pad / grid>=2 path

    key = jax.random.PRNGKey(0)
    kx, kp = jax.random.split(key)
    x = jax.random.normal(kx, (batch, num_feats), dtype=jnp.float32)
    params = init_params(kp, num_feats, out_chs)

    act_dtype = _default_act_dtype()
    out = fc_model_forward(x, params, tile_b=1024,
                           compute_dtype=jnp.bfloat16, act_dtype=act_dtype)
    out = jax.block_until_ready(out)
    assert out.shape == (batch, out_chs)

    # Matched-precision reference (same bf16 MXU operands / activation dtype).
    ref_match = fc_model_reference(x, params, compute_dtype=jnp.bfloat16,
                                   act_dtype=act_dtype)
    assert jnp.allclose(out, ref_match, atol=2e-3, rtol=2e-3), \
        "mismatch vs matched-precision reference"

    # Sanity vs. the pure-f32 forward (bf16 operands compound small error).
    ref_f32 = fc_model_reference(x, params, compute_dtype=jnp.float32,
                                 act_dtype=jnp.float32)
    assert jnp.allclose(out, ref_f32, atol=5e-2, rtol=5e-2), \
        "mismatch vs f32 reference"

    print("KERNEL_OK")
</pallas_src>

<mosaic_0001>
module attributes {stable_mosaic.version = 11 : i64} {
  func.func @_fc_model_kernel(%arg0: i32, %arg1: memref<256x32xbf16, #tpu.memory_space<vmem>>, %arg2: memref<32x64xbf16, #tpu.memory_space<vmem>>, %arg3: memref<3x64x64xbf16, #tpu.memory_space<vmem>>, %arg4: memref<64x32xbf16, #tpu.memory_space<vmem>>, %arg5: memref<32x8xbf16, #tpu.memory_space<vmem>>, %arg6: memref<6x64xf32, #tpu.memory_space<vmem>>, %arg7: memref<256x8xf32, #tpu.memory_space<vmem>>) attributes {dimension_semantics = [#tpu.dimension_semantics<parallel>], iteration_bounds = array<i64: 2>, scalar_prefetch = 0 : i64, scratch_operands = 0 : i64, tpu.core_type = #tpu.core_type<tc>, window_params = [{transform_indices = @transform_0, window_bounds = array<i64: 256, 32>}, {pipeline_mode = #tpu.pipeline_mode<synchronous>, transform_indices = @transform_1, window_bounds = array<i64: 32, 64>}, {pipeline_mode = #tpu.pipeline_mode<synchronous>, transform_indices = @transform_2, window_bounds = array<i64: 3, 64, 64>}, {pipeline_mode = #tpu.pipeline_mode<synchronous>, transform_indices = @transform_3, window_bounds = array<i64: 64, 32>}, {pipeline_mode = #tpu.pipeline_mode<synchronous>, transform_indices = @transform_4, window_bounds = array<i64: 32, 8>}, {pipeline_mode = #tpu.pipeline_mode<synchronous>, transform_indices = @transform_5, window_bounds = array<i64: 6, 64>}, {transform_indices = @transform_6, window_bounds = array<i64: 256, 8>}]} {
    %c0 = arith.constant 0 : index
    %c0_0 = arith.constant 0 : index
    %0 = vector.load %arg1[%c0, %c0_0] : memref<256x32xbf16, #tpu.memory_space<vmem>>, vector<256x32xbf16>
    %c0_1 = arith.constant 0 : index
    %c0_2 = arith.constant 0 : index
    %1 = vector.load %arg2[%c0_1, %c0_2] : memref<32x64xbf16, #tpu.memory_space<vmem>>, vector<32x64xbf16>
    %c0_3 = arith.constant 0 : index
    %c0_4 = arith.constant 0 : index
    %2 = vector.load %arg6[%c0_3, %c0_4] : memref<6x64xf32, #tpu.memory_space<vmem>>, vector<1x64xf32>
    %cst = arith.constant dense<0.000000e+00> : vector<256x64xf32>
    %3 = tpu.matmul %0, %1, %cst {dimension_numbers = #tpu.dot_dimension_numbers<[1], [0], [0], [1], [0, 0, 1, 1], [], []>} : vector<256x32xbf16>, vector<32x64xbf16>, vector<256x64xf32> -> vector<256x64xf32>
    %4 = vector.broadcast %2 : vector<1x64xf32> to vector<256x64xf32>
    %5 = arith.addf %3, %4 : vector<256x64xf32>
    %cst_5 = arith.constant 0.000000e+00 : f32
    %6 = vector.broadcast %cst_5 : f32 to vector<256x64xf32>
    %7 = arith.maximumf %5, %6 : vector<256x64xf32>
    %c0_6 = arith.constant 0 : index
    %c0_7 = arith.constant 0 : index
    %c0_8 = arith.constant 0 : index
    %8 = vector.load %arg3[%c0_6, %c0_7, %c0_8] : memref<3x64x64xbf16, #tpu.memory_space<vmem>>, vector<1x64x64xbf16>
    %9 = vector.shape_cast %8 : vector<1x64x64xbf16> to vector<64x64xbf16>
    %c1 = arith.constant 1 : index
    %c0_9 = arith.constant 0 : index
    %10 = vector.load %arg6[%c1, %c0_9] : memref<6x64xf32, #tpu.memory_space<vmem>>, vector<1x64xf32>
    %11 = arith.truncf %7 : vector<256x64xf32> to vector<256x64xbf16>
    %cst_10 = arith.constant dense<0.000000e+00> : vector<256x64xf32>
    %12 = tpu.matmul %11, %9, %cst_10 {dimension_numbers = #tpu.dot_dimension_numbers<[1], [0], [0], [1], [0, 0, 1, 1], [], []>} : vector<256x64xbf16>, vector<64x64xbf16>, vector<256x64xf32> -> vector<256x64xf32>
    %13 = vector.broadcast %10 : vector<1x64xf32> to vector<256x64xf32>
    %14 = arith.addf %12, %13 : vector<256x64xf32>
    %cst_11 = arith.constant 0.000000e+00 : f32
    %15 = vector.broadcast %cst_11 : f32 to vector<256x64xf32>
    %16 = arith.maximumf %14, %15 : vector<256x64xf32>
    %17 = arith.addf %16, %7 : vector<256x64xf32>
    %c1_12 = arith.constant 1 : index
    %c0_13 = arith.constant 0 : index
    %c0_14 = arith.constant 0 : index
    %18 = vector.load %arg3[%c1_12, %c0_13, %c0_14] : memref<3x64x64xbf16, #tpu.memory_space<vmem>>, vector<1x64x64xbf16>
    %19 = vector.shape_cast %18 : vector<1x64x64xbf16> to vector<64x64xbf16>
    %c2 = arith.constant 2 : index
    %c0_15 = arith.constant 0 : index
    %20 = vector.load %arg6[%c2, %c0_15] : memref<6x64xf32, #tpu.memory_space<vmem>>, vector<1x64xf32>
    %21 = arith.truncf %17 : vector<256x64xf32> to vector<256x64xbf16>
    %cst_16 = arith.constant dense<0.000000e+00> : vector<256x64xf32>
    %22 = tpu.matmul %21, %19, %cst_16 {dimension_numbers = #tpu.dot_dimension_numbers<[1], [0], [0], [1], [0, 0, 1, 1], [], []>} : vector<256x64xbf16>, vector<64x64xbf16>, vector<256x64xf32> -> vector<256x64xf32>
    %23 = vector.broadcast %20 : vector<1x64xf32> to vector<256x64xf32>
    %24 = arith.addf %22, %23 : vector<256x64xf32>
    %cst_17 = arith.constant 0.000000e+00 : f32
    %25 = vector.broadcast %cst_17 : f32 to vector<256x64xf32>
    %26 = arith.maximumf %24, %25 : vector<256x64xf32>
    %c2_18 = arith.constant 2 : index
    %c0_19 = arith.constant 0 : index
    %c0_20 = arith.constant 0 : index
    %27 = vector.load %arg3[%c2_18, %c0_19, %c0_20] : memref<3x64x64xbf16, #tpu.memory_space<vmem>>, vector<1x64x64xbf16>
    %28 = vector.shape_cast %27 : vector<1x64x64xbf16> to vector<64x64xbf16>
    %c3 = arith.constant 3 : index
    %c0_21 = arith.constant 0 : index
    %29 = vector.load %arg6[%c3, %c0_21] : memref<6x64xf32, #tpu.memory_space<vmem>>, vector<1x64xf32>
    %30 = arith.truncf %26 : vector<256x64xf32> to vector<256x64xbf16>
    %cst_22 = arith.constant dense<0.000000e+00> : vector<256x64xf32>
    %31 = tpu.matmul %30, %28, %cst_22 {dimension_numbers = #tpu.dot_dimension_numbers<[1], [0], [0], [1], [0, 0, 1, 1], [], []>} : vector<256x64xbf16>, vector<64x64xbf16>, vector<256x64xf32> -> vector<256x64xf32>
    %32 = vector.broadcast %29 : vector<1x64xf32> to vector<256x64xf32>
    %33 = arith.addf %31, %32 : vector<256x64xf32>
    %cst_23 = arith.constant 0.000000e+00 : f32
    %34 = vector.broadcast %cst_23 : f32 to vector<256x64xf32>
    %35 = arith.maximumf %33, %34 : vector<256x64xf32>
    %36 = arith.addf %35, %26 : vector<256x64xf32>
    %c0_24 = arith.constant 0 : index
    %c0_25 = arith.constant 0 : index
    %37 = vector.load %arg4[%c0_24, %c0_25] : memref<64x32xbf16, #tpu.memory_space<vmem>>, vector<64x32xbf16>
    %c4 = arith.constant 4 : index
    %c0_26 = arith.constant 0 : index
    %38 = vector.load %arg6[%c4, %c0_26] : memref<6x64xf32, #tpu.memory_space<vmem>>, vector<1x32xf32>
    %39 = arith.truncf %36 : vector<256x64xf32> to vector<256x64xbf16>
    %cst_27 = arith.constant dense<0.000000e+00> : vector<256x32xf32>
    %40 = tpu.matmul %39, %37, %cst_27 {dimension_numbers = #tpu.dot_dimension_numbers<[1], [0], [0], [1], [0, 0, 1, 1], [], []>} : vector<256x64xbf16>, vector<64x32xbf16>, vector<256x32xf32> -> vector<256x32xf32>
    %41 = vector.broadcast %38 : vector<1x32xf32> to vector<256x32xf32>
    %42 = arith.addf %40, %41 : vector<256x32xf32>
    %cst_28 = arith.constant 0.000000e+00 : f32
    %43 = vector.broadcast %cst_28 : f32 to vector<256x32xf32>
    %44 = arith.maximumf %42, %43 : vector<256x32xf32>
    %45 = arith.truncf %44 : vector<256x32xf32> to vector<256x32xbf16>
    %c0_29 = arith.constant 0 : index
    %c0_30 = arith.constant 0 : index
    %46 = vector.load %arg5[%c0_29, %c0_30] : memref<32x8xbf16, #tpu.memory_space<vmem>>, vector<32x8xbf16>
    %cst_31 = arith.constant dense<0.000000e+00> : vector<256x8xf32>
    %47 = tpu.matmul %45, %46, %cst_31 {dimension_numbers = #tpu.dot_dimension_numbers<[1], [0], [0], [1], [0, 0, 1, 1], [], []>} : vector<256x32xbf16>, vector<32x8xbf16>, vector<256x8xf32> -> vector<256x8xf32>
    %c5 = arith.constant 5 : index
    %c0_32 = arith.constant 0 : index
    %48 = vector.load %arg6[%c5, %c0_32] : memref<6x64xf32, #tpu.memory_space<vmem>>, vector<1x8xf32>
    %49 = vector.broadcast %48 : vector<1x8xf32> to vector<256x8xf32>
    %50 = arith.addf %47, %49 : vector<256x8xf32>
    %c0_33 = arith.constant 0 : index
    %c0_34 = arith.constant 0 : index
    %51 = vector.load %arg7[%c0_33, %c0_34] : memref<256x8xf32, #tpu.memory_space<vmem>>, vector<256x8xf32>
    tpu.vector_store %arg7[%c0_33, %c0_34], %50 {strides = array<i32>} : memref<256x8xf32, #tpu.memory_space<vmem>>, vector<256x8xf32>,
    return
  }
  func.func @transform_0(%arg0: i32) -> (i32, i32) {
    %c0_i32 = arith.constant 0 : i32
    %c0_i32_0 = arith.constant 0 : i32
    return %arg0, %c0_i32 : i32, i32
  }
  func.func @transform_1(%arg0: i32) -> (i32, i32) {
    %c0_i32 = arith.constant 0 : i32
    %c0_i32_0 = arith.constant 0 : i32
    %c0_i32_1 = arith.constant 0 : i32
    return %c0_i32, %c0_i32_0 : i32, i32
  }
  func.func @transform_2(%arg0: i32) -> (i32, i32, i32) {
    %c0_i32 = arith.constant 0 : i32
    %c0_i32_0 = arith.constant 0 : i32
    %c0_i32_1 = arith.constant 0 : i32
    %c0_i32_2 = arith.constant 0 : i32
    return %c0_i32, %c0_i32_0, %c0_i32_1 : i32, i32, i32
  }
  func.func @transform_3(%arg0: i32) -> (i32, i32) {
    %c0_i32 = arith.constant 0 : i32
    %c0_i32_0 = arith.constant 0 : i32
    %c0_i32_1 = arith.constant 0 : i32
    return %c0_i32, %c0_i32_0 : i32, i32
  }
  func.func @transform_4(%arg0: i32) -> (i32, i32) {
    %c0_i32 = arith.constant 0 : i32
    %c0_i32_0 = arith.constant 0 : i32
    %c0_i32_1 = arith.constant 0 : i32
    return %c0_i32, %c0_i32_0 : i32, i32
  }
  func.func @transform_5(%arg0: i32) -> (i32, i32) {
    %c0_i32 = arith.constant 0 : i32
    %c0_i32_0 = arith.constant 0 : i32
    %c0_i32_1 = arith.constant 0 : i32
    return %c0_i32, %c0_i32_0 : i32, i32
  }
  func.func @transform_6(%arg0: i32) -> (i32, i32) {
    %c0_i32 = arith.constant 0 : i32
    %c0_i32_0 = arith.constant 0 : i32
    return %arg0, %c0_i32 : i32, i32
  }
}

</mosaic_0001>

<llo_original>
// kernel: _fc_model_forward.1
$region0: #{_fc_model_forward.1}
  #allocation0 [shape = 'u32[]', space=smem, size = 0x4, offset = 0x4, fixed_abs, tag = 'smem constant byte address 0x4 - core index']
  #allocation1 [shape = 'u32[144,128]{1,0:T(1,128)}', space=vmem, size = 0x12000, scoped, tag = 'internal scratch']
  %s0 = inlined_call_operand.vmem [shape: bf16[512,32], index: 0, kind: input, shape index: {}]
  %s1 = inlined_call_operand.vmem [shape: bf16[32,64], index: 1, kind: input, shape index: {}]
  %s2 = inlined_call_operand.vmem [shape: bf16[3,64,64], index: 2, kind: input, shape index: {}]
  %s3 = inlined_call_operand.vmem [shape: bf16[64,32], index: 3, kind: input, shape index: {}]
  %s4 = inlined_call_operand.vmem [shape: bf16[32,8], index: 4, kind: input, shape index: {}]
  %s5 = inlined_call_operand.vmem [shape: f32[6,64], index: 5, kind: input, shape index: {}]
  %s6 = inlined_call_operand.vmem [shape: f32[512,8], index: 6, kind: output, shape index: {}]
  %s7 = sld [smem:[#allocation0]]
  $region57: #{_fc_model_forward.1} parent=0
    _
  %s9 = ssub.s32 1, %s7
  %s10 = scalar_select 0, %s9, %s7
  loop: start=0, step=1, limit=4
  $region2: #{_fc_model_forward.1} parent=0 // loop_pre_header
    _
  $region3: #{_fc_model_forward.1} parent=0 // loop_header
    %s12 = sphi 0, %s16
    %p13 = scmp.ge.s32.totalorder %s12, 4
    %s22 = sphi 0, %s24
    %s25 = sphi 0, %s22
    %s26 = sphi 0, %s25
    %s42 = sphi 0, %s26
    %s46 = sphi 0, %s46
    %s48 = sphi 0, %s46
    %s49 = sphi 0, %s48
    %s63 = sphi 0, %s49
    %s67 = sphi 0, %s67
    %s69 = sphi 0, %s67
    %s70 = sphi 0, %s69
    %s84 = sphi 0, %s70
    %s88 = sphi 0, %s88
    %s90 = sphi 0, %s88
    %s91 = sphi 0, %s90
    %s105 = sphi 0, %s91
    %s109 = sphi 0, %s109
    %s111 = sphi 0, %s109
    %s112 = sphi 0, %s111
    %s126 = sphi 0, %s112
    %s130 = sphi 0, %s130
    %s132 = sphi 0, %s130
    %s133 = sphi 0, %s132
    %s147 = sphi 0, %s133
    %s153 = sphi 0, %s155
    %s156 = sphi 0, %s153
    %s157 = sphi 0, %s156
    %s173 = sphi 0, %s157
  $region4: #{_fc_model_forward.1} parent=0 // loop_header_branch
    %15 = sbr.rel (%p13) target = $region8
  $region5: #{_fc_model_forward.1} parent=0 // loop_body
    %s17 = ssub.s32 %s12, 1
    %s18 = ssub.s32 %s12, 2
    %s19 = sadd.s32 %s12, 1
    %s20 = ssub.s32 %s12, %s19
    %p21 = scmp.eq.s32.totalorder %s20, 0
    %s23 = sadd.s32 %s22, 1
    %s24 = scalar_select %p21, %s22, %s23
    %p27 = pneg %p21
    %p28 = scmp.eq.s32.totalorder %s12, 1
    %p29 = por %p27, %p28
    %p30 = scmp.ne.s32.totalorder %s22, %s25
    %p31 = scmp.eq.s32.totalorder %s12, 0
    %p32 = por %p30, %p31
    %p33 = scmp.ne.s32.totalorder %s22, %s25
    %p34 = scmp.eq.s32.totalorder %s17, 1
    %p35 = por %p33, %p34
    %p36 = scmp.ne.s32.totalorder %s25, %s26
    %p37 = scmp.eq.s32.totalorder %s17, 0
    %p38 = por %p36, %p37
    %p39 = scmp.ne.s32.totalorder %s25, %s26
    %p40 = scmp.eq.s32.totalorder %s18, 1
    %p41 = por %p39, %p40
    %p43 = scmp.ne.s32.totalorder %s26, %s42
    %p44 = scmp.eq.s32.totalorder %s18, 0
    %p45 = por %p43, %p44
    %s47 = sadd.s32 %s46, 1
    %p50 = scmp.eq.s32.totalorder %s12, 1
    %p51 = scmp.ne.s32.totalorder %s46, %s48
    %p52 = scmp.eq.s32.totalorder %s12, 0
    %p53 = por %p51, %p52
    %p54 = scmp.ne.s32.totalorder %s46, %s48
    %p55 = scmp.eq.s32.totalorder %s17, 1
    %p56 = por %p54, %p55
    %p57 = scmp.ne.s32.totalorder %s48, %s49
    %p58 = scmp.eq.s32.totalorder %s17, 0
    %p59 = por %p57, %p58
    %p60 = scmp.ne.s32.totalorder %s48, %s49
    %p61 = scmp.eq.s32.totalorder %s18, 1
    %p62 = por %p60, %p61
    %p64 = scmp.ne.s32.totalorder %s49, %s63
    %p65 = scmp.eq.s32.totalorder %s18, 0
    %p66 = por %p64, %p65
    %s68 = sadd.s32 %s67, 1
    %p71 = scmp.eq.s32.totalorder %s12, 1
    %p72 = scmp.ne.s32.totalorder %s67, %s69
    %p73 = scmp.eq.s32.totalorder %s12, 0
    %p74 = por %p72, %p73
    %p75 = scmp.ne.s32.totalorder %s67, %s69
    %p76 = scmp.eq.s32.totalorder %s17, 1
    %p77 = por %p75, %p76
    %p78 = scmp.ne.s32.totalorder %s69, %s70
    %p79 = scmp.eq.s32.totalorder %s17, 0
    %p80 = por %p78, %p79
    %p81 = scmp.ne.s32.totalorder %s69, %s70
    %p82 = scmp.eq.s32.totalorder %s18, 1
    %p83 = por %p81, %p82
    %p85 = scmp.ne.s32.totalorder %s70, %s84
    %p86 = scmp.eq.s32.totalorder %s18, 0
    %p87 = por %p85, %p86
    %s89 = sadd.s32 %s88, 1
    %p92 = scmp.eq.s32.totalorder %s12, 1
    %p93 = scmp.ne.s32.totalorder %s88, %s90
    %p94 = scmp.eq.s32.totalorder %s12, 0
    %p95 = por %p93, %p94
    %p96 = scmp.ne.s32.totalorder %s88, %s90
    %p97 = scmp.eq.s32.totalorder %s17, 1
    %p98 = por %p96, %p97
    %p99 = scmp.ne.s32.totalorder %s90, %s91
    %p100 = scmp.eq.s32.totalorder %s17, 0
    %p101 = por %p99, %p100
    %p102 = scmp.ne.s32.totalorder %s90, %s91
    %p103 = scmp.eq.s32.totalorder %s18, 1
    %p104 = por %p102, %p103
    %p106 = scmp.ne.s32.totalorder %s91, %s105
    %p107 = scmp.eq.s32.totalorder %s18, 0
    %p108 = por %p106, %p107
    %s110 = sadd.s32 %s109, 1
    %p113 = scmp.eq.s32.totalorder %s12, 1
    %p114 = scmp.ne.s32.totalorder %s109, %s111
    %p115 = scmp.eq.s32.totalorder %s12, 0
    %p116 = por %p114, %p115
    %p117 = scmp.ne.s32.totalorder %s109, %s111
    %p118 = scmp.eq.s32.totalorder %s17, 1
    %p119 = por %p117, %p118
    %p120 = scmp.ne.s32.totalorder %s111, %s112
    %p121 = scmp.eq.s32.totalorder %s17, 0
    %p122 = por %p120, %p121
    %p123 = scmp.ne.s32.totalorder %s111, %s112
    %p124 = scmp.eq.s32.totalorder %s18, 1
    %p125 = por %p123, %p124
    %p127 = scmp.ne.s32.totalorder %s112, %s126
    %p128 = scmp.eq.s32.totalorder %s18, 0
    %p129 = por %p127, %p128
    %s131 = sadd.s32 %s130, 1
    %p134 = scmp.eq.s32.totalorder %s12, 1
    %p135 = scmp.ne.s32.totalorder %s130, %s132
    %p136 = scmp.eq.s32.totalorder %s12, 0
    %p137 = por %p135, %p136
    %p138 = scmp.ne.s32.totalorder %s130, %s132
    %p139 = scmp.eq.s32.totalorder %s17, 1
    %p140 = por %p138, %p139
    %p141 = scmp.ne.s32.totalorder %s132, %s133
    %p142 = scmp.eq.s32.totalorder %s17, 0
    %p143 = por %p141, %p142
    %p144 = scmp.ne.s32.totalorder %s132, %s133
    %p145 = scmp.eq.s32.totalorder %s18, 1
    %p146 = por %p144, %p145
    %p148 = scmp.ne.s32.totalorder %s133, %s147
    %p149 = scmp.eq.s32.totalorder %s18, 0
    %p150 = por %p148, %p149
    %s151 = ssub.s32 %s12, %s19
    %p152 = scmp.eq.s32.totalorder %s151, 0
    %s154 = sadd.s32 %s153, 1
    %s155 = scalar_select %p152, %s153, %s154
    %p158 = pneg %p152
    %p159 = scmp.eq.s32.totalorder %s12, 1
    %p160 = por %p158, %p159
    %p161 = scmp.ne.s32.totalorder %s153, %s156
    %p162 = scmp.eq.s32.totalorder %s12, 0
    %p163 = por %p161, %p162
    %p164 = scmp.ne.s32.totalorder %s153, %s156
    %p165 = scmp.eq.s32.totalorder %s17, 1
    %p166 = por %p164, %p165
    %p167 = scmp.ne.s32.totalorder %s156, %s157
    %p168 = scmp.eq.s32.totalorder %s17, 0
    %p169 = por %p167, %p168
    %p170 = scmp.ne.s32.totalorder %s156, %s157
    %p171 = scmp.eq.s32.totalorder %s18, 1
    %p172 = por %p170, %p171
    %p174 = scmp.ne.s32.totalorder %s157, %s173
    %p175 = scmp.eq.s32.totalorder %s18, 0
    %p176 = por %p174, %p175
    %p177 = scmp.le.s32.totalorder 1, %s12
    %p178 = scmp.lt.s32.totalorder %s12, 3
    %p179 = pnand %p177, %p178
    %p180 = pneg %p179
    // Predicated region
    $region9: #{_fc_model_forward.1} parent=5 // pred_check
      _
    $region10: #{_fc_model_forward.1} parent=5 // pred_check_branch
      %182 = sbr.rel (%p179) target = $region12
    $region11: #{_fc_model_forward.1} parent=5 // pred_region
      %s183 = ssub.s32 %s12, 1
      // Predicated region
      $region13: #{_fc_model_forward.1} parent=11 // pred_check
        %p184 = pneg %p59
      $region14: #{_fc_model_forward.1} parent=11 // pred_check_branch
        %186 = sbr.rel (%p184) target = $region16
      $region15: #{_fc_model_forward.1} parent=11 // pred_region
        _
      $region16: #{_fc_model_forward.1} parent=11 // pred_fallthru
        _
      // Predicated region
      $region17: #{_fc_model_forward.1} parent=11 // pred_check
        %p187 = pneg %p80
      $region18: #{_fc_model_forward.1} parent=11 // pred_check_branch
        %189 = sbr.rel (%p187) target = $region20
      $region19: #{_fc_model_forward.1} parent=11 // pred_region
        _
      $region20: #{_fc_model_forward.1} parent=11 // pred_fallthru
        _
      // Predicated region
      $region21: #{_fc_model_forward.1} parent=11 // pred_check
        %p190 = pneg %p101
      $region22: #{_fc_model_forward.1} parent=11 // pred_check_branch
        %192 = sbr.rel (%p190) target = $region24
      $region23: #{_fc_model_forward.1} parent=11 // pred_region
        _
      $region24: #{_fc_model_forward.1} parent=11 // pred_fallthru
        _
      // Predicated region
      $region25: #{_fc_model_forward.1} parent=11 // pred_check
        %p193 = pneg %p122
      $region26: #{_fc_model_forward.1} parent=11 // pred_check_branch
        %195 = sbr.rel (%p193) target = $region28
      $region27: #{_fc_model_forward.1} parent=11 // pred_region
        _
      $region28: #{_fc_model_forward.1} parent=11 // pred_fallthru
        _
      // Predicated region
      $region29: #{_fc_model_forward.1} parent=11 // pred_check
        %p196 = pneg %p143
      $region30: #{_fc_model_forward.1} parent=11 // pred_check_branch
        %198 = sbr.rel (%p196) target = $region32
      $region31: #{_fc_model_forward.1} parent=11 // pred_region
        _
      $region32: #{_fc_model_forward.1} parent=11 // pred_fallthru
        _
    $region12: #{_fc_model_forward.1} parent=5 // pred_fallthru
      _
    %p199 = scmp.lt.s32.totalorder %s12, 2
    // Predicated region
    $region33: #{_fc_model_forward.1} parent=5 // pred_check
      %p200 = pneg %p199
    $region34: #{_fc_model_forward.1} parent=5 // pred_check_branch
      %202 = sbr.rel (%p200) target = $region36
    $region35: #{_fc_model_forward.1} parent=5 // pred_region
      // Predicated region
      $region37: #{_fc_model_forward.1} parent=35 // pred_check
        %p203 = pneg %p32
      $region38: #{_fc_model_forward.1} parent=35 // pred_check_branch
        %205 = sbr.rel (%p203) target = $region40
      $region39: #{_fc_model_forward.1} parent=35 // pred_region
        %s206 = smul.u32 32, %s12
        %p207 = scmp.lt.s32.totalorder %s206, 63
        %s208 = scalar_select %p207, %s206, 63
        %s209 = smul.addr %s208, 4
        %s210 = scalar_lea.vmem %s0, %s209
        %s211 = smul.u32 32, %s12
      $region40: #{_fc_model_forward.1} parent=35 // pred_fallthru
        _
    $region36: #{_fc_model_forward.1} parent=5 // pred_fallthru
      _
    %p212 = scmp.le.s32.totalorder 1, %s12
    %p213 = scmp.lt.s32.totalorder %s12, 3
    %p214 = pnand %p212, %p213
    %p215 = pneg %p214
    // Predicated region
    $region41: #{_fc_model_forward.1} parent=5 // pred_check
      _
    $region42: #{_fc_model_forward.1} parent=5 // pred_check_branch
      %217 = sbr.rel (%p214) target = $region44
    $region43: #{_fc_model_forward.1} parent=5 // pred_region
      %s218 = ssub.s32 %s12, 1
      %s219 = smul.u32 32, %s17
      %p220 = scmp.lt.s32.totalorder %s219, 63
      %s221 = scalar_select %p220, %s219, 63
      %s222 = smul.addr %s221, 4
      %s223 = scalar_lea.vmem %s0, %s222
      %p224 = pneg %p38
      %p225 = pneg %p35
      %p226 = pneg %p59
      %p227 = pneg %p56
      %p228 = pneg %p80
      %p229 = pneg %p77
      %p230 = pneg %p101
      %p231 = pneg %p98
      %p232 = pneg %p122
      %p233 = pneg %p119
      %p234 = pneg %p143
      %p235 = pneg %p140
      %p236 = pneg %p169
      %p237 = pneg %p166
      %s238 = smul.u32 32, %s17
      %p239 = scmp.lt.s32.totalorder %s238, 63
      %s240 = scalar_select %p239, %s238, 63
      %s241 = smul.addr %s240, 8
      %s242 = scalar_lea.vmem %s6, %s241
      %s243 = smul.u32 32, %s17
      %p244 = scmp.lt.s32.totalorder %s243, 63
      %s245 = scalar_select %p244, %s243, 63
      %s246 = smul.addr %s245, 4
      %s247 = scalar_lea.vmem %s0, %s246
      %s248 = smul.u32 32, %s17
      %s249 = smul.u32 32, %s17
      %p250 = scmp.lt.s32.totalorder %s249, 63
      %s251 = scalar_select %p250, %s249, 63
      %s252 = smul.addr %s251, 8
      %s253 = scalar_lea.vmem %s6, %s252
      %s254 = smul.u32 32, %s17
      %v256 = vld [vmem:[%s247] sm:$0xf]
      %v257 = vld [vmem:[%s247 + $0x4] sm:$0xf]
      %v258 = vld [vmem:[%s247 + $0x8] sm:$0xf]
      %v259 = vld [vmem:[%s247 + $0xc] sm:$0xf]
      %v260 = vld [vmem:[%s247 + $0x10] sm:$0xf]
      %v261 = vld [vmem:[%s247 + $0x14] sm:$0xf]
      %v262 = vld [vmem:[%s247 + $0x18] sm:$0xf]
      %v263 = vld [vmem:[%s247 + $0x1c] sm:$0xf]
      %v264 = vld [vmem:[%s247 + $0x20] sm:$0xf]
      %v265 = vld [vmem:[%s247 + $0x24] sm:$0xf]
      %v266 = vld [vmem:[%s247 + $0x28] sm:$0xf]
      %v267 = vld [vmem:[%s247 + $0x2c] sm:$0xf]
      %v268 = vld [vmem:[%s247 + $0x30] sm:$0xf]
      %v269 = vld [vmem:[%s247 + $0x34] sm:$0xf]
      %v270 = vld [vmem:[%s247 + $0x38] sm:$0xf]
      %v271 = vld [vmem:[%s247 + $0x3c] sm:$0xf]
      %v272 = vld [vmem:[%s247 + $0x40] sm:$0xf]
      %v273 = vld [vmem:[%s247 + $0x44] sm:$0xf]
      %v274 = vld [vmem:[%s247 + $0x48] sm:$0xf]
      %v275 = vld [vmem:[%s247 + $0x4c] sm:$0xf]
      %v276 = vld [vmem:[%s247 + $0x50] sm:$0xf]
      %v277 = vld [vmem:[%s247 + $0x54] sm:$0xf]
      %v278 = vld [vmem:[%s247 + $0x58] sm:$0xf]
      %v279 = vld [vmem:[%s247 + $0x5c] sm:$0xf]
      %v280 = vld [vmem:[%s247 + $0x60] sm:$0xf]
      %v281 = vld [vmem:[%s247 + $0x64] sm:$0xf]
      %v282 = vld [vmem:[%s247 + $0x68] sm:$0xf]
      %v283 = vld [vmem:[%s247 + $0x6c] sm:$0xf]
      %v284 = vld [vmem:[%s247 + $0x70] sm:$0xf]
      %v285 = vld [vmem:[%s247 + $0x74] sm:$0xf]
      %v286 = vld [vmem:[%s247 + $0x78] sm:$0xf]
      %v287 = vld [vmem:[%s247 + $0x7c] sm:$0xf]
      %v288 = vld [vmem:[%s1] sm:$0xf]
      %v289 = vld [vmem:[%s1 + $0x4] sm:$0xf]
      %v290 = vld [vmem:[%s1 + $0x8] sm:$0xf]
      %v291 = vld [vmem:[%s1 + $0xc] sm:$0xf]
      %v292 = vld [vmem:[%s5] sm:$0x1]
      %v293 = vlaneseq
      %v294 = vshrl.u32 %v293, 7
      %v295 = vsub.s32 0, %v294
      %v296 = vrot.slane %v292, %v295
      %v329 = vunpack.c.l.b16 %v256
      %v330 = vunpack.c.l.b16 %v257
      %v331 = vunpack.c.l.b16 %v258
      %v332 = vunpack.c.l.b16 %v259
      %v333 = vunpack.c.l.b16 %v260
      %v334 = vunpack.c.l.b16 %v261
      %v335 = vunpack.c.l.b16 %v262
      %v336 = vunpack.c.l.b16 %v263
      %v337 = vunpack.c.l.b16 %v264
      %v338 = vunpack.c.l.b16 %v265
      %v339 = vunpack.c.l.b16 %v266
      %v340 = vunpack.c.l.b16 %v267
      %v341 = vunpack.c.l.b16 %v268
      %v342 = vunpack.c.l.b16 %v269
      %v343 = vunpack.c.l.b16 %v270
      %v344 = vunpack.c.l.b16 %v271
      %v345 = vunpack.c.l.b16 %v272
      %v346 = vunpack.c.l.b16 %v273
      %v347 = vunpack.c.l.b16 %v274
      %v348 = vunpack.c.l.b16 %v275
      %v349 = vunpack.c.l.b16 %v276
      %v350 = vunpack.c.l.b16 %v277
      %v351 = vunpack.c.l.b16 %v278
      %v352 = vunpack.c.l.b16 %v279
      %v353 = vunpack.c.l.b16 %v280
      %v354 = vunpack.c.l.b16 %v281
      %v355 = vunpack.c.l.b16 %v282
      %v356 = vunpack.c.l.b16 %v283
      %v357 = vunpack.c.l.b16 %v284
      %v358 = vunpack.c.l.b16 %v285
      %v359 = vunpack.c.l.b16 %v286
      %v360 = vunpack.c.l.b16 %v287
      %v361 = vpack.c.b16 %v330, %v329
      %v362 = vpack.c.b16 %v332, %v331
      %v363 = vpack.c.b16 %v334, %v333
      %v364 = vpack.c.b16 %v336, %v335
      %v365 = vpack.c.b16 %v338, %v337
      %v366 = vpack.c.b16 %v340, %v339
      %v367 = vpack.c.b16 %v342, %v341
      %v368 = vpack.c.b16 %v344, %v343
      %v369 = vpack.c.b16 %v346, %v345
      %v370 = vpack.c.b16 %v348, %v347
      %v371 = vpack.c.b16 %v350, %v349
      %v372 = vpack.c.b16 %v352, %v351
      %v373 = vpack.c.b16 %v354, %v353
      %v374 = vpack.c.b16 %v356, %v355
      %v375 = vpack.c.b16 %v358, %v357
      %v376 = vpack.c.b16 %v360, %v359
      %v381 = vunpack.c.l.b16 %v288
      %v382 = vunpack.c.l.b16 %v289
      %v383 = vunpack.c.l.b16 %v290
      %v384 = vunpack.c.l.b16 %v291
      %v385 = vpack.c.b16 %v382, %v381
      %v386 = vpack.c.b16 %v384, %v383
      %vm389 = vcmask 261120
      %v391 = vsel %vm389, %v361, 0
      %v394 = vsel %vm389, %v362, 0
      %v397 = vsel %vm389, %v363, 0
      %v400 = vsel %vm389, %v364, 0
      %v403 = vsel %vm389, %v365, 0
      %v406 = vsel %vm389, %v366, 0
      %v409 = vsel %vm389, %v367, 0
      %v412 = vsel %vm389, %v368, 0
      %v415 = vsel %vm389, %v369, 0
      %v418 = vsel %vm389, %v370, 0
      %v421 = vsel %vm389, %v371, 0
      %v424 = vsel %vm389, %v372, 0
      %v427 = vsel %vm389, %v373, 0
      %v430 = vsel %vm389, %v374, 0
      %v433 = vsel %vm389, %v375, 0
      %v436 = vsel %vm389, %v376, 0
      %438 = vmatprep.subr.bf16.mxu0 0
      %439 = vmatpush1.bf16.msra.mxu0 0
      %440 = vmatprep.subr.bf16.mxu0 0
      %441 = vmatpush1.bf16.msra.mxu0 0
      %442 = vmatprep.subr.bf16.mxu0 0
      %443 = vmatpush1.bf16.msra.mxu0 0
      %444 = vmatprep.subr.bf16.mxu0 0
      %445 = vmatpush1.bf16.msra.mxu0 0
      %446 = vmatprep.subr.bf16.mxu0 0
      %447 = vmatpush1.bf16.msra.mxu0 0
      %448 = vmatprep.subr.bf16.mxu0 0
      %449 = vmatpush1.bf16.msra.mxu0 0
      %450 = vmatprep.subr.bf16.mxu0 0
      %451 = vmatpush1.bf16.msra.mxu0 %v386
      %452 = vmatprep.subr.bf16.mxu0 0
      %453 = vmatpush1.bf16.msra.mxu0 %v385
      %454 = vmatprep.subr.bf16.mxu0 0
      %455 = vmatpush2.bf16.msra.mxu0 0
      %456 = vmatprep.subr.bf16.mxu0 0
      %457 = vmatpush2.bf16.msra.mxu0 0
      %458 = vmatprep.subr.bf16.mxu0 0
      %459 = vmatpush2.bf16.msra.mxu0 0
      %460 = vmatprep.subr.bf16.mxu0 0
      %461 = vmatpush2.bf16.msra.mxu0 0
      %462 = vmatprep.subr.bf16.mxu0 0
      %463 = vmatpush2.bf16.msra.mxu0 0
      %464 = vmatprep.subr.bf16.mxu0 0
      %465 = vmatpush2.bf16.msra.mxu0 0
      %466 = vmatprep.subr.bf16.mxu0 0
      %467 = vmatpush2.bf16.msra.mxu0 0
      %468 = vmatprep.subr.bf16.mxu0 0
      %469 = vmatpush2.bf16.msra.mxu0 0
      %470 = vmatprep.mubr.bf16.mxu0 0
      %471 = vmatmul.mubr.bf16.gmra.mxu0 %v391
      %v472 = vpop.f32.mrf.mxu0
      %v473 = vadd.f32 %v296, %v472
      %v474 = vpop.f32.mrf.mxu0
      %v475 = vpop.f32.mrf.mxu0
      %v476 = vadd.f32 %v296, %v475
      %v477 = vpop.f32.mrf.mxu0
      %478 = vmatprep.mubr.bf16.mxu0 0
      %479 = vmatmul.mubr.bf16.gmra.mxu0 %v394
      %v480 = vpop.f32.mrf.mxu0
      %v481 = vadd.f32 %v296, %v480
      %v482 = vpop.f32.mrf.mxu0
      %v483 = vpop.f32.mrf.mxu0
      %v484 = vadd.f32 %v296, %v483
      %v485 = vpop.f32.mrf.mxu0
      %486 = vmatprep.mubr.bf16.mxu0 0
      %487 = vmatmul.mubr.bf16.gmra.mxu0 %v397
      %v488 = vpop.f32.mrf.mxu0
      %v489 = vadd.f32 %v296, %v488
      %v490 = vpop.f32.mrf.mxu0
      %v491 = vpop.f32.mrf.mxu0
      %v492 = vadd.f32 %v296, %v491
      %v493 = vpop.f32.mrf.mxu0
      %494 = vmatprep.mubr.bf16.mxu0 0
      %495 = vmatmul.mubr.bf16.gmra.mxu0 %v400
      %v496 = vpop.f32.mrf.mxu0
      %v497 = vadd.f32 %v296, %v496
      %v498 = vpop.f32.mrf.mxu0
      %v499 = vpop.f32.mrf.mxu0
      %v500 = vadd.f32 %v296, %v499
      %v501 = vpop.f32.mrf.mxu0
      %502 = vmatprep.mubr.bf16.mxu0 0
      %503 = vmatmul.mubr.bf16.gmra.mxu0 %v403
      %v504 = vpop.f32.mrf.mxu0
      %v505 = vadd.f32 %v296, %v504
      %v506 = vpop.f32.mrf.mxu0
      %v507 = vpop.f32.mrf.mxu0
      %v508 = vadd.f32 %v296, %v507
      %v509 = vpop.f32.mrf.mxu0
      %510 = vmatprep.mubr.bf16.mxu0 0
      %511 = vmatmul.mubr.bf16.gmra.mxu0 %v406
      %v512 = vpop.f32.mrf.mxu0
      %v513 = vadd.f32 %v296, %v512
      %v514 = vpop.f32.mrf.mxu0
      %v515 = vpop.f32.mrf.mxu0
      %v516 = vadd.f32 %v296, %v515
      %v517 = vpop.f32.mrf.mxu0
      %518 = vmatprep.mubr.bf16.mxu0 0
      %519 = vmatmul.mubr.bf16.gmra.mxu0 %v409
      %v520 = vpop.f32.mrf.mxu0
      %v521 = vadd.f32 %v296, %v520
      %v522 = vpop.f32.mrf.mxu0
      %v523 = vpop.f32.mrf.mxu0
      %v524 = vadd.f32 %v296, %v523
      %v525 = vpop.f32.mrf.mxu0
      %526 = vmatprep.mubr.bf16.mxu0 0
      %527 = vmatmul.mubr.bf16.gmra.mxu0 %v412
      %v528 = vpop.f32.mrf.mxu0
      %v529 = vadd.f32 %v296, %v528
      %v530 = vpop.f32.mrf.mxu0
      %v531 = vpop.f32.mrf.mxu0
      %v532 = vadd.f32 %v296, %v531
      %v533 = vpop.f32.mrf.mxu0
      %534 = vmatprep.mubr.bf16.mxu0 0
      %535 = vmatmul.mubr.bf16.gmra.mxu0 %v415
      %v536 = vpop.f32.mrf.mxu0
      %v537 = vadd.f32 %v296, %v536
      %v538 = vpop.f32.mrf.mxu0
      %v539 = vpop.f32.mrf.mxu0
      %v540 = vadd.f32 %v296, %v539
      %v541 = vpop.f32.mrf.mxu0
      %542 = vmatprep.mubr.bf16.mxu0 0
      %543 = vmatmul.mubr.bf16.gmra.mxu0 %v418
      %v544 = vpop.f32.mrf.mxu0
      %v545 = vadd.f32 %v296, %v544
      %v546 = vpop.f32.mrf.mxu0
      %v547 = vpop.f32.mrf.mxu0
      %v548 = vadd.f32 %v296, %v547
      %v549 = vpop.f32.mrf.mxu0
      %550 = vmatprep.mubr.bf16.mxu0 0
      %551 = vmatmul.mubr.bf16.gmra.mxu0 %v421
      %v552 = vpop.f32.mrf.mxu0
      %v553 = vadd.f32 %v296, %v552
      %v554 = vpop.f32.mrf.mxu0
      %v555 = vpop.f32.mrf.mxu0
      %v556 = vadd.f32 %v296, %v555
      %v557 = vpop.f32.mrf.mxu0
      %558 = vmatprep.mubr.bf16.mxu0 0
      %559 = vmatmul.mubr.bf16.gmra.mxu0 %v424
      %v560 = vpop.f32.mrf.mxu0
      %v561 = vadd.f32 %v296, %v560
      %v562 = vpop.f32.mrf.mxu0
      %v563 = vpop.f32.mrf.mxu0
      %v564 = vadd.f32 %v296, %v563
      %v565 = vpop.f32.mrf.mxu0
      %566 = vmatprep.mubr.bf16.mxu0 0
      %567 = vmatmul.mubr.bf16.gmra.mxu0 %v427
      %v568 = vpop.f32.mrf.mxu0
      %v569 = vadd.f32 %v296, %v568
      %v570 = vpop.f32.mrf.mxu0
      %v571 = vpop.f32.mrf.mxu0
      %v572 = vadd.f32 %v296, %v571
      %v573 = vpop.f32.mrf.mxu0
      %574 = vmatprep.mubr.bf16.mxu0 0
      %575 = vmatmul.mubr.bf16.gmra.mxu0 %v430
      %v576 = vpop.f32.mrf.mxu0
      %v577 = vadd.f32 %v296, %v576
      %v578 = vpop.f32.mrf.mxu0
      %v579 = vpop.f32.mrf.mxu0
      %v580 = vadd.f32 %v296, %v579
      %v581 = vpop.f32.mrf.mxu0
      %582 = vmatprep.mubr.bf16.mxu0 0
      %583 = vmatmul.mubr.bf16.gmra.mxu0 %v433
      %v584 = vpop.f32.mrf.mxu0
      %v585 = vadd.f32 %v296, %v584
      %v586 = vpop.f32.mrf.mxu0
      %v587 = vpop.f32.mrf.mxu0
      %v588 = vadd.f32 %v296, %v587
      %v589 = vpop.f32.mrf.mxu0
      %590 = vmatprep.mubr.bf16.mxu0 0
      %591 = vmatmul.mubr.bf16.gmra.mxu0 %v436
      %v592 = vpop.f32.mrf.mxu0
      %v593 = vadd.f32 %v296, %v592
      %v594 = vpop.f32.mrf.mxu0
      %v595 = vpop.f32.mrf.mxu0
      %v596 = vadd.f32 %v296, %v595
      %v597 = vpop.f32.mrf.mxu0
      %598 = vdwg.mxu0
      %v599 = vmax.f32 %v473, 0.0
      %v600 = vmax.f32 %v476, 0.0
      %v601 = vmax.f32 %v481, 0.0
      %v602 = vmax.f32 %v484, 0.0
      %v603 = vmax.f32 %v489, 0.0
      %v604 = vmax.f32 %v492, 0.0
      %v605 = vmax.f32 %v497, 0.0
      %v606 = vmax.f32 %v500, 0.0
      %v607 = vmax.f32 %v505, 0.0
      %v608 = vmax.f32 %v508, 0.0
      %v609 = vmax.f32 %v513, 0.0
      %v610 = vmax.f32 %v516, 0.0
      %v611 = vmax.f32 %v521, 0.0
      %v612 = vmax.f32 %v524, 0.0
      %v613 = vmax.f32 %v529, 0.0
      %v614 = vmax.f32 %v532, 0.0
      %v615 = vmax.f32 %v537, 0.0
      %v616 = vmax.f32 %v540, 0.0
      %v617 = vmax.f32 %v545, 0.0
      %v618 = vmax.f32 %v548, 0.0
      %v619 = vmax.f32 %v553, 0.0
      %v620 = vmax.f32 %v556, 0.0
      %v621 = vmax.f32 %v561, 0.0
      %v622 = vmax.f32 %v564, 0.0
      %v623 = vmax.f32 %v569, 0.0
      %v624 = vmax.f32 %v572, 0.0
      %v625 = vmax.f32 %v577, 0.0
      %v626 = vmax.f32 %v580, 0.0
      %v627 = vmax.f32 %v585, 0.0
      %v628 = vmax.f32 %v588, 0.0
      %v629 = vmax.f32 %v593, 0.0
      %v630 = vmax.f32 %v596, 0.0
      %v631 = vld [vmem:[%s2] sm:$0xf]
      %v632 = vld [vmem:[%s2 + $0x4] sm:$0xf]
      %v633 = vld [vmem:[%s2 + $0x8] sm:$0xf]
      %v634 = vld [vmem:[%s2 + $0xc] sm:$0xf]
      %v635 = vld [vmem:[%s2 + $0x10] sm:$0xf]
      %v636 = vld [vmem:[%s2 + $0x14] sm:$0xf]
      %v637 = vld [vmem:[%s2 + $0x18] sm:$0xf]
      %v638 = vld [vmem:[%s2 + $0x1c] sm:$0xf]
      %v639 = vld [vmem:[%s5 + $0x1] sm:$0x1]
      %v640 = vpack.c.bf16 %v600, %v599
      %v641 = vpack.c.bf16 %v602, %v601
      %v642 = vpack.c.bf16 %v604, %v603
      %v643 = vpack.c.bf16 %v606, %v605
      %v644 = vpack.c.bf16 %v608, %v607
      %v645 = vpack.c.bf16 %v610, %v609
      %v646 = vpack.c.bf16 %v612, %v611
      %v647 = vpack.c.bf16 %v614, %v613
      %v648 = vpack.c.bf16 %v616, %v615
      %v649 = vpack.c.bf16 %v618, %v617
      %v650 = vpack.c.bf16 %v620, %v619
      %v651 = vpack.c.bf16 %v622, %v621
      %v652 = vpack.c.bf16 %v624, %v623
      %v653 = vpack.c.bf16 %v626, %v625
      %v654 = vpack.c.bf16 %v628, %v627
      %v655 = vpack.c.bf16 %v630, %v629
      %v656 = vlaneseq
      %v657 = vshrl.u32 %v656, 7
      %v658 = vsub.s32 0, %v657
      %v659 = vrot.slane %v639, %v658
      %v668 = vunpack.c.l.b16 %v631
      %v669 = vunpack.c.l.b16 %v632
      %v670 = vunpack.c.l.b16 %v633
      %v671 = vunpack.c.l.b16 %v634
      %v672 = vunpack.c.l.b16 %v635
      %v673 = vunpack.c.l.b16 %v636
      %v674 = vunpack.c.l.b16 %v637
      %v675 = vunpack.c.l.b16 %v638
      %v676 = vpack.c.b16 %v669, %v668
      %v677 = vpack.c.b16 %v671, %v670
      %v678 = vpack.c.b16 %v673, %v672
      %v679 = vpack.c.b16 %v675, %v674
      %vm684 = vcmask 523264
      %v686 = vsel %vm684, %v640, 0
      %v689 = vsel %vm684, %v641, 0
      %v692 = vsel %vm684, %v642, 0
      %v695 = vsel %vm684, %v643, 0
      %v698 = vsel %vm684, %v644, 0
      %v701 = vsel %vm684, %v645, 0
      %v704 = vsel %vm684, %v646, 0
      %v707 = vsel %vm684, %v647, 0
      %v710 = vsel %vm684, %v648, 0
      %v713 = vsel %vm684, %v649, 0
      %v716 = vsel %vm684, %v650, 0
      %v719 = vsel %vm684, %v651, 0
      %v722 = vsel %vm684, %v652, 0
      %v725 = vsel %vm684, %v653, 0
      %v728 = vsel %vm684, %v654, 0
      %v731 = vsel %vm684, %v655, 0
      %733 = vmatprep.subr.bf16.mxu0 0
      %734 = vmatpush1.bf16.msra.mxu0 0
      %735 = vmatprep.subr.bf16.mxu0 0
      %736 = vmatpush1.bf16.msra.mxu0 0
      %737 = vmatprep.subr.bf16.mxu0 0
      %738 = vmatpush1.bf16.msra.mxu0 0
      %739 = vmatprep.subr.bf16.mxu0 0
      %740 = vmatpush1.bf16.msra.mxu0 0
      %741 = vmatprep.subr.bf16.mxu0 0
      %742 = vmatpush1.bf16.msra.mxu0 %v679
      %743 = vmatprep.subr.bf16.mxu0 0
      %744 = vmatpush1.bf16.msra.mxu0 %v678
      %745 = vmatprep.subr.bf16.mxu0 0
      %746 = vmatpush1.bf16.msra.mxu0 %v677
      %747 = vmatprep.subr.bf16.mxu0 0
      %748 = vmatpush1.bf16.msra.mxu0 %v676
      %749 = vmatprep.subr.bf16.mxu0 0
      %750 = vmatpush2.bf16.msra.mxu0 0
      %751 = vmatprep.subr.bf16.mxu0 0
      %752 = vmatpush2.bf16.msra.mxu0 0
      %753 = vmatprep.subr.bf16.mxu0 0
      %754 = vmatpush2.bf16.msra.mxu0 0
      %755 = vmatprep.subr.bf16.mxu0 0
      %756 = vmatpush2.bf16.msra.mxu0 0
      %757 = vmatprep.subr.bf16.mxu0 0
      %758 = vmatpush2.bf16.msra.mxu0 0
      %759 = vmatprep.subr.bf16.mxu0 0
      %760 = vmatpush2.bf16.msra.mxu0 0
      %761 = vmatprep.subr.bf16.mxu0 0
      %762 = vmatpush2.bf16.msra.mxu0 0
      %763 = vmatprep.subr.bf16.mxu0 0
      %764 = vmatpush2.bf16.msra.mxu0 0
      %765 = vmatprep.mubr.bf16.mxu0 0
      %766 = vmatmul.mubr.bf16.gmra.mxu0 %v686
      %v767 = vpop.f32.mrf.mxu0
      %v768 = vadd.f32 %v659, %v767
      %v769 = vpop.f32.mrf.mxu0
      %v770 = vpop.f32.mrf.mxu0
      %v771 = vadd.f32 %v659, %v770
      %v772 = vpop.f32.mrf.mxu0
      %773 = vmatprep.mubr.bf16.mxu0 0
      %774 = vmatmul.mubr.bf16.gmra.mxu0 %v689
      %v775 = vpop.f32.mrf.mxu0
      %v776 = vadd.f32 %v659, %v775
      %v777 = vpop.f32.mrf.mxu0
      %v778 = vpop.f32.mrf.mxu0
      %v779 = vadd.f32 %v659, %v778
      %v780 = vpop.f32.mrf.mxu0
      %781 = vmatprep.mubr.bf16.mxu0 0
      %782 = vmatmul.mubr.bf16.gmra.mxu0 %v692
      %v783 = vpop.f32.mrf.mxu0
      %v784 = vadd.f32 %v659, %v783
      %v785 = vpop.f32.mrf.mxu0
      %v786 = vpop.f32.mrf.mxu0
      %v787 = vadd.f32 %v659, %v786
      %v788 = vpop.f32.mrf.mxu0
      %789 = vmatprep.mubr.bf16.mxu0 0
      %790 = vmatmul.mubr.bf16.gmra.mxu0 %v695
      %v791 = vpop.f32.mrf.mxu0
      %v792 = vadd.f32 %v659, %v791
      %v793 = vpop.f32.mrf.mxu0
      %v794 = vpop.f32.mrf.mxu0
      %v795 = vadd.f32 %v659, %v794
      %v796 = vpop.f32.mrf.mxu0
      %797 = vmatprep.mubr.bf16.mxu0 0
      %798 = vmatmul.mubr.bf16.gmra.mxu0 %v698
      %v799 = vpop.f32.mrf.mxu0
      %v800 = vadd.f32 %v659, %v799
      %v801 = vpop.f32.mrf.mxu0
      %v802 = vpop.f32.mrf.mxu0
      %v803 = vadd.f32 %v659, %v802
      %v804 = vpop.f32.mrf.mxu0
      %805 = vmatprep.mubr.bf16.mxu0 0
      %806 = vmatmul.mubr.bf16.gmra.mxu0 %v701
      %v807 = vpop.f32.mrf.mxu0
      %v808 = vadd.f32 %v659, %v807
      %v809 = vpop.f32.mrf.mxu0
      %v810 = vpop.f32.mrf.mxu0
      %v811 = vadd.f32 %v659, %v810
      %v812 = vpop.f32.mrf.mxu0
      %813 = vmatprep.mubr.bf16.mxu0 0
      %814 = vmatmul.mubr.bf16.gmra.mxu0 %v704
      %v815 = vpop.f32.mrf.mxu0
      %v816 = vadd.f32 %v659, %v815
      %v817 = vpop.f32.mrf.mxu0
      %v818 = vpop.f32.mrf.mxu0
      %v819 = vadd.f32 %v659, %v818
      %v820 = vpop.f32.mrf.mxu0
      %821 = vmatprep.mubr.bf16.mxu0 0
      %822 = vmatmul.mubr.bf16.gmra.mxu0 %v707
      %v823 = vpop.f32.mrf.mxu0
      %v824 = vadd.f32 %v659, %v823
      %v825 = vpop.f32.mrf.mxu0
      %v826 = vpop.f32.mrf.mxu0
      %v827 = vadd.f32 %v659, %v826
      %v828 = vpop.f32.mrf.mxu0
      %829 = vmatprep.mubr.bf16.mxu0 0
      %830 = vmatmul.mubr.bf16.gmra.mxu0 %v710
      %v831 = vpop.f32.mrf.mxu0
      %v832 = vadd.f32 %v659, %v831
      %v833 = vpop.f32.mrf.mxu0
      %v834 = vpop.f32.mrf.mxu0
      %v835 = vadd.f32 %v659, %v834
      %v836 = vpop.f32.mrf.mxu0
      %837 = vmatprep.mubr.bf16.mxu0 0
      %838 = vmatmul.mubr.bf16.gmra.mxu0 %v713
      %v839 = vpop.f32.mrf.mxu0
      %v840 = vadd.f32 %v659, %v839
      %v841 = vpop.f32.mrf.mxu0
      %v842 = vpop.f32.mrf.mxu0
      %v843 = vadd.f32 %v659, %v842
      %v844 = vpop.f32.mrf.mxu0
      %845 = vmatprep.mubr.bf16.mxu0 0
      %846 = vmatmul.mubr.bf16.gmra.mxu0 %v716
      %v847 = vpop.f32.mrf.mxu0
      %v848 = vadd.f32 %v659, %v847
      %v849 = vpop.f32.mrf.mxu0
      %v850 = vpop.f32.mrf.mxu0
      %v851 = vadd.f32 %v659, %v850
      %v852 = vpop.f32.mrf.mxu0
      %853 = vmatprep.mubr.bf16.mxu0 0
      %854 = vmatmul.mubr.bf16.gmra.mxu0 %v719
      %v855 = vpop.f32.mrf.mxu0
      %v856 = vadd.f32 %v659, %v855
      %v857 = vpop.f32.mrf.mxu0
      %v858 = vpop.f32.mrf.mxu0
      %v859 = vadd.f32 %v659, %v858
      %v860 = vpop.f32.mrf.mxu0
      %861 = vmatprep.mubr.bf16.mxu0 0
      %862 = vmatmul.mubr.bf16.gmra.mxu0 %v722
      %v863 = vpop.f32.mrf.mxu0
      %v864 = vadd.f32 %v659, %v863
      %v865 = vpop.f32.mrf.mxu0
      %v866 = vpop.f32.mrf.mxu0
      %v867 = vadd.f32 %v659, %v866
      %v868 = vpop.f32.mrf.mxu0
      %869 = vmatprep.mubr.bf16.mxu0 0
      %870 = vmatmul.mubr.bf16.gmra.mxu0 %v725
      %v871 = vpop.f32.mrf.mxu0
      %v872 = vadd.f32 %v659, %v871
      %v873 = vpop.f32.mrf.mxu0
      %v874 = vpop.f32.mrf.mxu0
      %v875 = vadd.f32 %v659, %v874
      %v876 = vpop.f32.mrf.mxu0
      %877 = vmatprep.mubr.bf16.mxu0 0
      %878 = vmatmul.mubr.bf16.gmra.mxu0 %v728
      %v879 = vpop.f32.mrf.mxu0
      %v880 = vadd.f32 %v659, %v879
      %v881 = vpop.f32.mrf.mxu0
      %v882 = vpop.f32.mrf.mxu0
      %v883 = vadd.f32 %v659, %v882
      %v884 = vpop.f32.mrf.mxu0
      %885 = vmatprep.mubr.bf16.mxu0 0
      %886 = vmatmul.mubr.bf16.gmra.mxu0 %v731
      %v887 = vpop.f32.mrf.mxu0
      %v888 = vadd.f32 %v659, %v887
      %v889 = vpop.f32.mrf.mxu0
      %v890 = vpop.f32.mrf.mxu0
      %v891 = vadd.f32 %v659, %v890
      %v892 = vpop.f32.mrf.mxu0
      %893 = vdwg.mxu0
      %v894 = vmax.f32 %v768, 0.0
      %v895 = vmax.f32 %v771, 0.0
      %v896 = vmax.f32 %v776, 0.0
      %v897 = vmax.f32 %v779, 0.0
      %v898 = vmax.f32 %v784, 0.0
      %v899 = vmax.f32 %v787, 0.0
      %v900 = vmax.f32 %v792, 0.0
      %v901 = vmax.f32 %v795, 0.0
      %v902 = vmax.f32 %v800, 0.0
      %v903 = vmax.f32 %v803, 0.0
      %v904 = vmax.f32 %v808, 0.0
      %v905 = vmax.f32 %v811, 0.0
      %v906 = vmax.f32 %v816, 0.0
      %v907 = vmax.f32 %v819, 0.0
      %v908 = vmax.f32 %v824, 0.0
      %v909 = vmax.f32 %v827, 0.0
      %v910 = vmax.f32 %v832, 0.0
      %v911 = vmax.f32 %v835, 0.0
      %v912 = vmax.f32 %v840, 0.0
      %v913 = vmax.f32 %v843, 0.0
      %v914 = vmax.f32 %v848, 0.0
      %v915 = vmax.f32 %v851, 0.0
      %v916 = vmax.f32 %v856, 0.0
      %v917 = vmax.f32 %v859, 0.0
      %v918 = vmax.f32 %v864, 0.0
      %v919 = vmax.f32 %v867, 0.0
      %v920 = vmax.f32 %v872, 0.0
      %v921 = vmax.f32 %v875, 0.0
      %v922 = vmax.f32 %v880, 0.0
      %v923 = vmax.f32 %v883, 0.0
      %v924 = vmax.f32 %v888, 0.0
      %v925 = vmax.f32 %v891, 0.0
      %v926 = vadd.f32 %v894, %v599
      %v927 = vadd.f32 %v895, %v600
      %v928 = vadd.f32 %v896, %v601
      %v929 = vadd.f32 %v897, %v602
      %v930 = vadd.f32 %v898, %v603
      %v931 = vadd.f32 %v899, %v604
      %v932 = vadd.f32 %v900, %v605
      %v933 = vadd.f32 %v901, %v606
      %v934 = vadd.f32 %v902, %v607
      %v935 = vadd.f32 %v903, %v608
      %v936 = vadd.f32 %v904, %v609
      %v937 = vadd.f32 %v905, %v610
      %v938 = vadd.f32 %v906, %v611
      %v939 = vadd.f32 %v907, %v612
      %v940 = vadd.f32 %v908, %v613
      %v941 = vadd.f32 %v909, %v614
      %v942 = vadd.f32 %v910, %v615
      %v943 = vadd.f32 %v911, %v616
      %v944 = vadd.f32 %v912, %v617
      %v945 = vadd.f32 %v913, %v618
      %v946 = vadd.f32 %v914, %v619
      %v947 = vadd.f32 %v915, %v620
      %v948 = vadd.f32 %v916, %v621
      %v949 = vadd.f32 %v917, %v622
      %v950 = vadd.f32 %v918, %v623
      %v951 = vadd.f32 %v919, %v624
      %v952 = vadd.f32 %v920, %v625
      %v953 = vadd.f32 %v921, %v626
      %v954 = vadd.f32 %v922, %v627
      %v955 = vadd.f32 %v923, %v628
      %v956 = vadd.f32 %v924, %v629
      %v957 = vadd.f32 %v925, %v630
      %s958 = scalar_lea.vmem %s2, 32
      %v959 = vld [vmem:[%s958] sm:$0xf]
      %v960 = vld [vmem:[%s958 + $0x4] sm:$0xf]
      %v961 = vld [vmem:[%s958 + $0x8] sm:$0xf]
      %v962 = vld [vmem:[%s958 + $0xc] sm:$0xf]
      %v963 = vld [vmem:[%s958 + $0x10] sm:$0xf]
      %v964 = vld [vmem:[%s958 + $0x14] sm:$0xf]
      %v965 = vld [vmem:[%s958 + $0x18] sm:$0xf]
      %v966 = vld [vmem:[%s958 + $0x1c] sm:$0xf]
      %v967 = vld [vmem:[%s5 + $0x2] sm:$0x1]
      %v968 = vpack.c.bf16 %v927, %v926
      %v969 = vpack.c.bf16 %v929, %v928
      %v970 = vpack.c.bf16 %v931, %v930
      %v971 = vpack.c.bf16 %v933, %v932
      %v972 = vpack.c.bf16 %v935, %v934
      %v973 = vpack.c.bf16 %v937, %v936
      %v974 = vpack.c.bf16 %v939, %v938
      %v975 = vpack.c.bf16 %v941, %v940
      %v976 = vpack.c.bf16 %v943, %v942
      %v977 = vpack.c.bf16 %v945, %v944
      %v978 = vpack.c.bf16 %v947, %v946
      %v979 = vpack.c.bf16 %v949, %v948
      %v980 = vpack.c.bf16 %v951, %v950
      %v981 = vpack.c.bf16 %v953, %v952
      %v982 = vpack.c.bf16 %v955, %v954
      %v983 = vpack.c.bf16 %v957, %v956
      %v984 = vlaneseq
      %v985 = vshrl.u32 %v984, 7
      %v986 = vsub.s32 0, %v985
      %v987 = vrot.slane %v967, %v986
      %v996 = vunpack.c.l.b16 %v959
      %v997 = vunpack.c.l.b16 %v960
      %v998 = vunpack.c.l.b16 %v961
      %v999 = vunpack.c.l.b16 %v962
      %v1000 = vunpack.c.l.b16 %v963
      %v1001 = vunpack.c.l.b16 %v964
      %v1002 = vunpack.c.l.b16 %v965
      %v1003 = vunpack.c.l.b16 %v966
      %v1004 = vpack.c.b16 %v997, %v996
      %v1005 = vpack.c.b16 %v999, %v998
      %v1006 = vpack.c.b16 %v1001, %v1000
      %v1007 = vpack.c.b16 %v1003, %v1002
      %v1013 = vsel %vm684, %v968, 0
      %v1016 = vsel %vm684, %v969, 0
      %v1019 = vsel %vm684, %v970, 0
      %v1022 = vsel %vm684, %v971, 0
      %v1025 = vsel %vm684, %v972, 0
      %v1028 = vsel %vm684, %v973, 0
      %v1031 = vsel %vm684, %v974, 0
      %v1034 = vsel %vm684, %v975, 0
      %v1037 = vsel %vm684, %v976, 0
      %v1040 = vsel %vm684, %v977, 0
      %v1043 = vsel %vm684, %v978, 0
      %v1046 = vsel %vm684, %v979, 0
      %v1049 = vsel %vm684, %v980, 0
      %v1052 = vsel %vm684, %v981, 0
      %v1055 = vsel %vm684, %v982, 0
      %v1058 = vsel %vm684, %v983, 0
      %1060 = vmatprep.subr.bf16.mxu0 0
      %1061 = vmatpush1.bf16.msra.mxu0 0
      %1062 = vmatprep.subr.bf16.mxu0 0
      %1063 = vmatpush1.bf16.msra.mxu0 0
      %1064 = vmatprep.subr.bf16.mxu0 0
      %1065 = vmatpush1.bf16.msra.mxu0 0
      %1066 = vmatprep.subr.bf16.mxu0 0
      %1067 = vmatpush1.bf16.msra.mxu0 0
      %1068 = vmatprep.subr.bf16.mxu0 0
      %1069 = vmatpush1.bf16.msra.mxu0 %v1007
      %1070 = vmatprep.subr.bf16.mxu0 0
      %1071 = vmatpush1.bf16.msra.mxu0 %v1006
      %1072 = vmatprep.subr.bf16.mxu0 0
      %1073 = vmatpush1.bf16.msra.mxu0 %v1005
      %1074 = vmatprep.subr.bf16.mxu0 0
      %1075 = vmatpush1.bf16.msra.mxu0 %v1004
      %1076 = vmatprep.subr.bf16.mxu0 0
      %1077 = vmatpush2.bf16.msra.mxu0 0
      %1078 = vmatprep.subr.bf16.mxu0 0
      %1079 = vmatpush2.bf16.msra.mxu0 0
      %1080 = vmatprep.subr.bf16.mxu0 0
      %1081 = vmatpush2.bf16.msra.mxu0 0
      %1082 = vmatprep.subr.bf16.mxu0 0
      %1083 = vmatpush2.bf16.msra.mxu0 0
      %1084 = vmatprep.subr.bf16.mxu0 0
      %1085 = vmatpush2.bf16.msra.mxu0 0
      %1086 = vmatprep.subr.bf16.mxu0 0
      %1087 = vmatpush2.bf16.msra.mxu0 0
      %1088 = vmatprep.subr.bf16.mxu0 0
      %1089 = vmatpush2.bf16.msra.mxu0 0
      %1090 = vmatprep.subr.bf16.mxu0 0
      %1091 = vmatpush2.bf16.msra.mxu0 0
      %1092 = vmatprep.mubr.bf16.mxu0 0
      %1093 = vmatmul.mubr.bf16.gmra.mxu0 %v1013
      %v1094 = vpop.f32.mrf.mxu0
      %v1095 = vadd.f32 %v987, %v1094
      %v1096 = vpop.f32.mrf.mxu0
      %v1097 = vpop.f32.mrf.mxu0
      %v1098 = vadd.f32 %v987, %v1097
      %v1099 = vpop.f32.mrf.mxu0
      %1100 = vmatprep.mubr.bf16.mxu0 0
      %1101 = vmatmul.mubr.bf16.gmra.mxu0 %v1016
      %v1102 = vpop.f32.mrf.mxu0
      %v1103 = vadd.f32 %v987, %v1102
      %v1104 = vpop.f32.mrf.mxu0
      %v1105 = vpop.f32.mrf.mxu0
      %v1106 = vadd.f32 %v987, %v1105
      %v1107 = vpop.f32.mrf.mxu0
      %1108 = vmatprep.mubr.bf16.mxu0 0
      %1109 = vmatmul.mubr.bf16.gmra.mxu0 %v1019
      %v1110 = vpop.f32.mrf.mxu0
      %v1111 = vadd.f32 %v987, %v1110
      %v1112 = vpop.f32.mrf.mxu0
      %v1113 = vpop.f32.mrf.mxu0
      %v1114 = vadd.f32 %v987, %v1113
      %v1115 = vpop.f32.mrf.mxu0
      %1116 = vmatprep.mubr.bf16.mxu0 0
      %1117 = vmatmul.mubr.bf16.gmra.mxu0 %v1022
      %v1118 = vpop.f32.mrf.mxu0
      %v1119 = vadd.f32 %v987, %v1118
      %v1120 = vpop.f32.mrf.mxu0
      %v1121 = vpop.f32.mrf.mxu0
      %v1122 = vadd.f32 %v987, %v1121
      %v1123 = vpop.f32.mrf.mxu0
      %1124 = vmatprep.mubr.bf16.mxu0 0
      %1125 = vmatmul.mubr.bf16.gmra.mxu0 %v1025
      %v1126 = vpop.f32.mrf.mxu0
      %v1127 = vadd.f32 %v987, %v1126
      %v1128 = vpop.f32.mrf.mxu0
      %v1129 = vpop.f32.mrf.mxu0
      %v1130 = vadd.f32 %v987, %v1129
      %v1131 = vpop.f32.mrf.mxu0
      %1132 = vmatprep.mubr.bf16.mxu0 0
      %1133 = vmatmul.mubr.bf16.gmra.mxu0 %v1028
      %v1134 = vpop.f32.mrf.mxu0
      %v1135 = vadd.f32 %v987, %v1134
      %v1136 = vpop.f32.mrf.mxu0
      %v1137 = vpop.f32.mrf.mxu0
      %v1138 = vadd.f32 %v987, %v1137
      %v1139 = vpop.f32.mrf.mxu0
      %1140 = vmatprep.mubr.bf16.mxu0 0
      %1141 = vmatmul.mubr.bf16.gmra.mxu0 %v1031
      %v1142 = vpop.f32.mrf.mxu0
      %v1143 = vadd.f32 %v987, %v1142
      %v1144 = vpop.f32.mrf.mxu0
      %v1145 = vpop.f32.mrf.mxu0
      %v1146 = vadd.f32 %v987, %v1145
      %v1147 = vpop.f32.mrf.mxu0
      %1148 = vmatprep.mubr.bf16.mxu0 0
      %1149 = vmatmul.mubr.bf16.gmra.mxu0 %v1034
      %v1150 = vpop.f32.mrf.mxu0
      %v1151 = vadd.f32 %v987, %v1150
      %v1152 = vpop.f32.mrf.mxu0
      %v1153 = vpop.f32.mrf.mxu0
      %v1154 = vadd.f32 %v987, %v1153
      %v1155 = vpop.f32.mrf.mxu0
      %1156 = vmatprep.mubr.bf16.mxu0 0
      %1157 = vmatmul.mubr.bf16.gmra.mxu0 %v1037
      %v1158 = vpop.f32.mrf.mxu0
      %v1159 = vadd.f32 %v987, %v1158
      %v1160 = vpop.f32.mrf.mxu0
      %v1161 = vpop.f32.mrf.mxu0
      %v1162 = vadd.f32 %v987, %v1161
      %v1163 = vpop.f32.mrf.mxu0
      %1164 = vmatprep.mubr.bf16.mxu0 0
      %1165 = vmatmul.mubr.bf16.gmra.mxu0 %v1040
      %v1166 = vpop.f32.mrf.mxu0
      %v1167 = vadd.f32 %v987, %v1166
      %v1168 = vpop.f32.mrf.mxu0
      %v1169 = vpop.f32.mrf.mxu0
      %v1170 = vadd.f32 %v987, %v1169
      %v1171 = vpop.f32.mrf.mxu0
      %1172 = vmatprep.mubr.bf16.mxu0 0
      %1173 = vmatmul.mubr.bf16.gmra.mxu0 %v1043
      %v1174 = vpop.f32.mrf.mxu0
      %v1175 = vadd.f32 %v987, %v1174
      %v1176 = vpop.f32.mrf.mxu0
      %v1177 = vpop.f32.mrf.mxu0
      %v1178 = vadd.f32 %v987, %v1177
      %v1179 = vpop.f32.mrf.mxu0
      %1180 = vmatprep.mubr.bf16.mxu0 0
      %1181 = vmatmul.mubr.bf16.gmra.mxu0 %v1046
      %v1182 = vpop.f32.mrf.mxu0
      %v1183 = vadd.f32 %v987, %v1182
      %v1184 = vpop.f32.mrf.mxu0
      %v1185 = vpop.f32.mrf.mxu0
      %v1186 = vadd.f32 %v987, %v1185
      %v1187 = vpop.f32.mrf.mxu0
      %1188 = vmatprep.mubr.bf16.mxu0 0
      %1189 = vmatmul.mubr.bf16.gmra.mxu0 %v1049
      %v1190 = vpop.f32.mrf.mxu0
      %v1191 = vadd.f32 %v987, %v1190
      %v1192 = vpop.f32.mrf.mxu0
      %v1193 = vpop.f32.mrf.mxu0
      %v1194 = vadd.f32 %v987, %v1193
      %v1195 = vpop.f32.mrf.mxu0
      %1196 = vmatprep.mubr.bf16.mxu0 0
      %1197 = vmatmul.mubr.bf16.gmra.mxu0 %v1052
      %v1198 = vpop.f32.mrf.mxu0
      %v1199 = vadd.f32 %v987, %v1198
      %v1200 = vpop.f32.mrf.mxu0
      %v1201 = vpop.f32.mrf.mxu0
      %v1202 = vadd.f32 %v987, %v1201
      %v1203 = vpop.f32.mrf.mxu0
      %1204 = vmatprep.mubr.bf16.mxu0 0
      %1205 = vmatmul.mubr.bf16.gmra.mxu0 %v1055
      %v1206 = vpop.f32.mrf.mxu0
      %v1207 = vadd.f32 %v987, %v1206
      %v1208 = vpop.f32.mrf.mxu0
      %v1209 = vpop.f32.mrf.mxu0
      %v1210 = vadd.f32 %v987, %v1209
      %v1211 = vpop.f32.mrf.mxu0
      %1212 = vmatprep.mubr.bf16.mxu0 0
      %1213 = vmatmul.mubr.bf16.gmra.mxu0 %v1058
      %v1214 = vpop.f32.mrf.mxu0
      %v1215 = vadd.f32 %v987, %v1214
      %v1216 = vpop.f32.mrf.mxu0
      %v1217 = vpop.f32.mrf.mxu0
      %v1218 = vadd.f32 %v987, %v1217
      %v1219 = vpop.f32.mrf.mxu0
      %1220 = vdwg.mxu0
      %v1221 = vmax.f32 %v1095, 0.0
      %v1222 = vmax.f32 %v1098, 0.0
      %v1223 = vmax.f32 %v1103, 0.0
      %v1224 = vmax.f32 %v1106, 0.0
      %v1225 = vmax.f32 %v1111, 0.0
      %v1226 = vmax.f32 %v1114, 0.0
      %v1227 = vmax.f32 %v1119, 0.0
      %v1228 = vmax.f32 %v1122, 0.0
      %v1229 = vmax.f32 %v1127, 0.0
      %v1230 = vmax.f32 %v1130, 0.0
      %v1231 = vmax.f32 %v1135, 0.0
      %v1232 = vmax.f32 %v1138, 0.0
      %v1233 = vmax.f32 %v1143, 0.0
      %v1234 = vmax.f32 %v1146, 0.0
      %v1235 = vmax.f32 %v1151, 0.0
      %v1236 = vmax.f32 %v1154, 0.0
      %v1237 = vmax.f32 %v1159, 0.0
      %v1238 = vmax.f32 %v1162, 0.0
      %v1239 = vmax.f32 %v1167, 0.0
      %v1240 = vmax.f32 %v1170, 0.0
      %v1241 = vmax.f32 %v1175, 0.0
      %v1242 = vmax.f32 %v1178, 0.0
      %v1243 = vmax.f32 %v1183, 0.0
      %v1244 = vmax.f32 %v1186, 0.0
      %v1245 = vmax.f32 %v1191, 0.0
      %v1246 = vmax.f32 %v1194, 0.0
      %v1247 = vmax.f32 %v1199, 0.0
      %v1248 = vmax.f32 %v1202, 0.0
      %v1249 = vmax.f32 %v1207, 0.0
      %v1250 = vmax.f32 %v1210, 0.0
      %v1251 = vmax.f32 %v1215, 0.0
      %v1252 = vmax.f32 %v1218, 0.0
      %s1253 = scalar_lea.vmem %s2, 64
      %v1254 = vld [vmem:[%s1253] sm:$0xf]
      %v1255 = vld [vmem:[%s1253 + $0x4] sm:$0xf]
      %v1256 = vld [vmem:[%s1253 + $0x8] sm:$0xf]
      %v1257 = vld [vmem:[%s1253 + $0xc] sm:$0xf]
      %v1258 = vld [vmem:[%s1253 + $0x10] sm:$0xf]
      %v1259 = vld [vmem:[%s1253 + $0x14] sm:$0xf]
      %v1260 = vld [vmem:[%s1253 + $0x18] sm:$0xf]
      %v1261 = vld [vmem:[%s1253 + $0x1c] sm:$0xf]
      %v1262 = vld [vmem:[%s5 + $0x3] sm:$0x1]
      %v1263 = vpack.c.bf16 %v1222, %v1221
      %v1264 = vpack.c.bf16 %v1224, %v1223
      %v1265 = vpack.c.bf16 %v1226, %v1225
      %v1266 = vpack.c.bf16 %v1228, %v1227
      %v1267 = vpack.c.bf16 %v1230, %v1229
      %v1268 = vpack.c.bf16 %v1232, %v1231
      %v1269 = vpack.c.bf16 %v1234, %v1233
      %v1270 = vpack.c.bf16 %v1236, %v1235
      %v1271 = vpack.c.bf16 %v1238, %v1237
      %v1272 = vpack.c.bf16 %v1240, %v1239
      %v1273 = vpack.c.bf16 %v1242, %v1241
      %v1274 = vpack.c.bf16 %v1244, %v1243
      %v1275 = vpack.c.bf16 %v1246, %v1245
      %v1276 = vpack.c.bf16 %v1248, %v1247
      %v1277 = vpack.c.bf16 %v1250, %v1249
      %v1278 = vpack.c.bf16 %v1252, %v1251
      %v1279 = vlaneseq
      %v1280 = vshrl.u32 %v1279, 7
      %v1281 = vsub.s32 0, %v1280
      %v1282 = vrot.slane %v1262, %v1281
      %v1291 = vunpack.c.l.b16 %v1254
      %v1292 = vunpack.c.l.b16 %v1255
      %v1293 = vunpack.c.l.b16 %v1256
      %v1294 = vunpack.c.l.b16 %v1257
      %v1295 = vunpack.c.l.b16 %v1258
      %v1296 = vunpack.c.l.b16 %v1259
      %v1297 = vunpack.c.l.b16 %v1260
      %v1298 = vunpack.c.l.b16 %v1261
      %v1299 = vpack.c.b16 %v1292, %v1291
      %v1300 = vpack.c.b16 %v1294, %v1293
      %v1301 = vpack.c.b16 %v1296, %v1295
      %v1302 = vpack.c.b16 %v1298, %v1297
      %v1308 = vsel %vm684, %v1263, 0
      %v1311 = vsel %vm684, %v1264, 0
      %v1314 = vsel %vm684, %v1265, 0
      %v1317 = vsel %vm684, %v1266, 0
      %v1320 = vsel %vm684, %v1267, 0
      %v1323 = vsel %vm684, %v1268, 0
      %v1326 = vsel %vm684, %v1269, 0
      %v1329 = vsel %vm684, %v1270, 0
      %v1332 = vsel %vm684, %v1271, 0
      %v1335 = vsel %vm684, %v1272, 0
      %v1338 = vsel %vm684, %v1273, 0
      %v1341 = vsel %vm684, %v1274, 0
      %v1344 = vsel %vm684, %v1275, 0
      %v1347 = vsel %vm684, %v1276, 0
      %v1350 = vsel %vm684, %v1277, 0
      %v1353 = vsel %vm684, %v1278, 0
      %1355 = vmatprep.subr.bf16.mxu0 0
      %1356 = vmatpush1.bf16.msra.mxu0 0
      %1357 = vmatprep.subr.bf16.mxu0 0
      %1358 = vmatpush1.bf16.msra.mxu0 0
      %1359 = vmatprep.subr.bf16.mxu0 0
      %1360 = vmatpush1.bf16.msra.mxu0 0
      %1361 = vmatprep.subr.bf16.mxu0 0
      %1362 = vmatpush1.bf16.msra.mxu0 0
      %1363 = vmatprep.subr.bf16.mxu0 0
      %1364 = vmatpush1.bf16.msra.mxu0 %v1302
      %1365 = vmatprep.subr.bf16.mxu0 0
      %1366 = vmatpush1.bf16.msra.mxu0 %v1301
      %1367 = vmatprep.subr.bf16.mxu0 0
      %1368 = vmatpush1.bf16.msra.mxu0 %v1300
      %1369 = vmatprep.subr.bf16.mxu0 0
      %1370 = vmatpush1.bf16.msra.mxu0 %v1299
      %1371 = vmatprep.subr.bf16.mxu0 0
      %1372 = vmatpush2.bf16.msra.mxu0 0
      %1373 = vmatprep.subr.bf16.mxu0 0
      %1374 = vmatpush2.bf16.msra.mxu0 0
      %1375 = vmatprep.subr.bf16.mxu0 0
      %1376 = vmatpush2.bf16.msra.mxu0 0
      %1377 = vmatprep.subr.bf16.mxu0 0
      %1378 = vmatpush2.bf16.msra.mxu0 0
      %1379 = vmatprep.subr.bf16.mxu0 0
      %1380 = vmatpush2.bf16.msra.mxu0 0
      %1381 = vmatprep.subr.bf16.mxu0 0
      %1382 = vmatpush2.bf16.msra.mxu0 0
      %1383 = vmatprep.subr.bf16.mxu0 0
      %1384 = vmatpush2.bf16.msra.mxu0 0
      %1385 = vmatprep.subr.bf16.mxu0 0
      %1386 = vmatpush2.bf16.msra.mxu0 0
      %1387 = vmatprep.mubr.bf16.mxu0 0
      %1388 = vmatmul.mubr.bf16.gmra.mxu0 %v1308
      %v1389 = vpop.f32.mrf.mxu0
      %v1390 = vadd.f32 %v1282, %v1389
      %v1391 = vpop.f32.mrf.mxu0
      %v1392 = vpop.f32.mrf.mxu0
      %v1393 = vadd.f32 %v1282, %v1392
      %v1394 = vpop.f32.mrf.mxu0
      %1395 = vmatprep.mubr.bf16.mxu0 0
      %1396 = vmatmul.mubr.bf16.gmra.mxu0 %v1311
      %v1397 = vpop.f32.mrf.mxu0
      %v1398 = vadd.f32 %v1282, %v1397
      %v1399 = vpop.f32.mrf.mxu0
      %v1400 = vpop.f32.mrf.mxu0
      %v1401 = vadd.f32 %v1282, %v1400
      %v1402 = vpop.f32.mrf.mxu0
      %1403 = vmatprep.mubr.bf16.mxu0 0
      %1404 = vmatmul.mubr.bf16.gmra.mxu0 %v1314
      %v1405 = vpop.f32.mrf.mxu0
      %v1406 = vadd.f32 %v1282, %v1405
      %v1407 = vpop.f32.mrf.mxu0
      %v1408 = vpop.f32.mrf.mxu0
      %v1409 = vadd.f32 %v1282, %v1408
      %v1410 = vpop.f32.mrf.mxu0
      %1411 = vmatprep.mubr.bf16.mxu0 0
      %1412 = vmatmul.mubr.bf16.gmra.mxu0 %v1317
      %v1413 = vpop.f32.mrf.mxu0
      %v1414 = vadd.f32 %v1282, %v1413
      %v1415 = vpop.f32.mrf.mxu0
      %v1416 = vpop.f32.mrf.mxu0
      %v1417 = vadd.f32 %v1282, %v1416
      %v1418 = vpop.f32.mrf.mxu0
      %1419 = vmatprep.mubr.bf16.mxu0 0
      %1420 = vmatmul.mubr.bf16.gmra.mxu0 %v1320
      %v1421 = vpop.f32.mrf.mxu0
      %v1422 = vadd.f32 %v1282, %v1421
      %v1423 = vpop.f32.mrf.mxu0
      %v1424 = vpop.f32.mrf.mxu0
      %v1425 = vadd.f32 %v1282, %v1424
      %v1426 = vpop.f32.mrf.mxu0
      %1427 = vmatprep.mubr.bf16.mxu0 0
      %1428 = vmatmul.mubr.bf16.gmra.mxu0 %v1323
      %v1429 = vpop.f32.mrf.mxu0
      %v1430 = vadd.f32 %v1282, %v1429
      %v1431 = vpop.f32.mrf.mxu0
      %v1432 = vpop.f32.mrf.mxu0
      %v1433 = vadd.f32 %v1282, %v1432
      %v1434 = vpop.f32.mrf.mxu0
      %1435 = vmatprep.mubr.bf16.mxu0 0
      %1436 = vmatmul.mubr.bf16.gmra.mxu0 %v1326
      %v1437 = vpop.f32.mrf.mxu0
      %v1438 = vadd.f32 %v1282, %v1437
      %v1439 = vpop.f32.mrf.mxu0
      %v1440 = vpop.f32.mrf.mxu0
      %v1441 = vadd.f32 %v1282, %v1440
      %v1442 = vpop.f32.mrf.mxu0
      %1443 = vmatprep.mubr.bf16.mxu0 0
      %1444 = vmatmul.mubr.bf16.gmra.mxu0 %v1329
      %v1445 = vpop.f32.mrf.mxu0
      %v1446 = vadd.f32 %v1282, %v1445
      %v1447 = vpop.f32.mrf.mxu0
      %v1448 = vpop.f32.mrf.mxu0
      %v1449 = vadd.f32 %v1282, %v1448
      %v1450 = vpop.f32.mrf.mxu0
      %1451 = vmatprep.mubr.bf16.mxu0 0
      %1452 = vmatmul.mubr.bf16.gmra.mxu0 %v1332
      %v1453 = vpop.f32.mrf.mxu0
      %v1454 = vadd.f32 %v1282, %v1453
      %v1455 = vpop.f32.mrf.mxu0
      %v1456 = vpop.f32.mrf.mxu0
      %v1457 = vadd.f32 %v1282, %v1456
      %v1458 = vpop.f32.mrf.mxu0
      %1459 = vmatprep.mubr.bf16.mxu0 0
      %1460 = vmatmul.mubr.bf16.gmra.mxu0 %v1335
      %v1461 = vpop.f32.mrf.mxu0
      %v1462 = vadd.f32 %v1282, %v1461
      %v1463 = vpop.f32.mrf.mxu0
      %v1464 = vpop.f32.mrf.mxu0
      %v1465 = vadd.f32 %v1282, %v1464
      %v1466 = vpop.f32.mrf.mxu0
      %1467 = vmatprep.mubr.bf16.mxu0 0
      %1468 = vmatmul.mubr.bf16.gmra.mxu0 %v1338
      %v1469 = vpop.f32.mrf.mxu0
      %v1470 = vadd.f32 %v1282, %v1469
      %v1471 = vpop.f32.mrf.mxu0
      %v1472 = vpop.f32.mrf.mxu0
      %v1473 = vadd.f32 %v1282, %v1472
      %v1474 = vpop.f32.mrf.mxu0
      %1475 = vmatprep.mubr.bf16.mxu0 0
      %1476 = vmatmul.mubr.bf16.gmra.mxu0 %v1341
      %v1477 = vpop.f32.mrf.mxu0
      %v1478 = vadd.f32 %v1282, %v1477
      %v1479 = vpop.f32.mrf.mxu0
      %v1480 = vpop.f32.mrf.mxu0
      %v1481 = vadd.f32 %v1282, %v1480
      %v1482 = vpop.f32.mrf.mxu0
      %1483 = vmatprep.mubr.bf16.mxu0 0
      %1484 = vmatmul.mubr.bf16.gmra.mxu0 %v1344
      %v1485 = vpop.f32.mrf.mxu0
      %v1486 = vadd.f32 %v1282, %v1485
      %v1487 = vpop.f32.mrf.mxu0
      %v1488 = vpop.f32.mrf.mxu0
      %v1489 = vadd.f32 %v1282, %v1488
      %v1490 = vpop.f32.mrf.mxu0
      %1491 = vmatprep.mubr.bf16.mxu0 0
      %1492 = vmatmul.mubr.bf16.gmra.mxu0 %v1347
      %v1493 = vpop.f32.mrf.mxu0
      %v1494 = vadd.f32 %v1282, %v1493
      %v1495 = vpop.f32.mrf.mxu0
      %v1496 = vpop.f32.mrf.mxu0
      %v1497 = vadd.f32 %v1282, %v1496
      %v1498 = vpop.f32.mrf.mxu0
      %1499 = vmatprep.mubr.bf16.mxu0 0
      %1500 = vmatmul.mubr.bf16.gmra.mxu0 %v1350
      %v1501 = vpop.f32.mrf.mxu0
      %v1502 = vadd.f32 %v1282, %v1501
      %v1503 = vpop.f32.mrf.mxu0
      %v1504 = vpop.f32.mrf.mxu0
      %v1505 = vadd.f32 %v1282, %v1504
      %v1506 = vpop.f32.mrf.mxu0
      %1507 = vmatprep.mubr.bf16.mxu0 0
      %1508 = vmatmul.mubr.bf16.gmra.mxu0 %v1353
      %v1509 = vpop.f32.mrf.mxu0
      %v1510 = vadd.f32 %v1282, %v1509
      %v1511 = vpop.f32.mrf.mxu0
      %v1512 = vpop.f32.mrf.mxu0
      %v1513 = vadd.f32 %v1282, %v1512
      %v1514 = vpop.f32.mrf.mxu0
      %1515 = vdwg.mxu0
      %v1516 = vmax.f32 %v1390, 0.0
      %v1517 = vmax.f32 %v1393, 0.0
      %v1518 = vmax.f32 %v1398, 0.0
      %v1519 = vmax.f32 %v1401, 0.0
      %v1520 = vmax.f32 %v1406, 0.0
      %v1521 = vmax.f32 %v1409, 0.0
      %v1522 = vmax.f32 %v1414, 0.0
      %v1523 = vmax.f32 %v1417, 0.0
      %v1524 = vmax.f32 %v1422, 0.0
      %v1525 = vmax.f32 %v1425, 0.0
      %v1526 = vmax.f32 %v1430, 0.0
      %v1527 = vmax.f32 %v1433, 0.0
      %v1528 = vmax.f32 %v1438, 0.0
      %v1529 = vmax.f32 %v1441, 0.0
      %v1530 = vmax.f32 %v1446, 0.0
      %v1531 = vmax.f32 %v1449, 0.0
      %v1532 = vmax.f32 %v1454, 0.0
      %v1533 = vmax.f32 %v1457, 0.0
      %v1534 = vmax.f32 %v1462, 0.0
      %v1535 = vmax.f32 %v1465, 0.0
      %v1536 = vmax.f32 %v1470, 0.0
      %v1537 = vmax.f32 %v1473, 0.0
      %v1538 = vmax.f32 %v1478, 0.0
      %v1539 = vmax.f32 %v1481, 0.0
      %v1540 = vmax.f32 %v1486, 0.0
      %v1541 = vmax.f32 %v1489, 0.0
      %v1542 = vmax.f32 %v1494, 0.0
      %v1543 = vmax.f32 %v1497, 0.0
      %v1544 = vmax.f32 %v1502, 0.0
      %v1545 = vmax.f32 %v1505, 0.0
      %v1546 = vmax.f32 %v1510, 0.0
      %v1547 = vmax.f32 %v1513, 0.0
      %v1548 = vadd.f32 %v1516, %v1221
      %v1549 = vadd.f32 %v1517, %v1222
      %v1550 = vadd.f32 %v1518, %v1223
      %v1551 = vadd.f32 %v1519, %v1224
      %v1552 = vadd.f32 %v1520, %v1225
      %v1553 = vadd.f32 %v1521, %v1226
      %v1554 = vadd.f32 %v1522, %v1227
      %v1555 = vadd.f32 %v1523, %v1228
      %v1556 = vadd.f32 %v1524, %v1229
      %v1557 = vadd.f32 %v1525, %v1230
      %v1558 = vadd.f32 %v1526, %v1231
      %v1559 = vadd.f32 %v1527, %v1232
      %v1560 = vadd.f32 %v1528, %v1233
      %v1561 = vadd.f32 %v1529, %v1234
      %v1562 = vadd.f32 %v1530, %v1235
      %v1563 = vadd.f32 %v1531, %v1236
      %v1564 = vadd.f32 %v1532, %v1237
      %v1565 = vadd.f32 %v1533, %v1238
      %v1566 = vadd.f32 %v1534, %v1239
      %v1567 = vadd.f32 %v1535, %v1240
      %v1568 = vadd.f32 %v1536, %v1241
      %v1569 = vadd.f32 %v1537, %v1242
      %v1570 = vadd.f32 %v1538, %v1243
      %v1571 = vadd.f32 %v1539, %v1244
      %v1572 = vadd.f32 %v1540, %v1245
      %v1573 = vadd.f32 %v1541, %v1246
      %v1574 = vadd.f32 %v1542, %v1247
      %v1575 = vadd.f32 %v1543, %v1248
      %v1576 = vadd.f32 %v1544, %v1249
      %v1577 = vadd.f32 %v1545, %v1250
      %v1578 = vadd.f32 %v1546, %v1251
      %v1579 = vadd.f32 %v1547, %v1252
      %v1580 = vld [vmem:[%s3] sm:$0xf]
      %v1581 = vld [vmem:[%s3 + $0x4] sm:$0xf]
      %v1582 = vld [vmem:[%s3 + $0x8] sm:$0xf]
      %v1583 = vld [vmem:[%s3 + $0xc] sm:$0xf]
      %v1584 = vld [vmem:[%s3 + $0x10] sm:$0xf]
      %v1585 = vld [vmem:[%s3 + $0x14] sm:$0xf]
      %v1586 = vld [vmem:[%s3 + $0x18] sm:$0xf]
      %v1587 = vld [vmem:[%s3 + $0x1c] sm:$0xf]
      %v1588 = vld [vmem:[%s5 + $0x4] sm:$0x1]
      %v1589 = vpack.c.bf16 %v1549, %v1548
      %v1590 = vpack.c.bf16 %v1551, %v1550
      %v1591 = vpack.c.bf16 %v1553, %v1552
      %v1592 = vpack.c.bf16 %v1555, %v1554
      %v1593 = vpack.c.bf16 %v1557, %v1556
      %v1594 = vpack.c.bf16 %v1559, %v1558
      %v1595 = vpack.c.bf16 %v1561, %v1560
      %v1596 = vpack.c.bf16 %v1563, %v1562
      %v1597 = vpack.c.bf16 %v1565, %v1564
      %v1598 = vpack.c.bf16 %v1567, %v1566
      %v1599 = vpack.c.bf16 %v1569, %v1568
      %v1600 = vpack.c.bf16 %v1571, %v1570
      %v1601 = vpack.c.bf16 %v1573, %v1572
      %v1602 = vpack.c.bf16 %v1575, %v1574
      %v1603 = vpack.c.bf16 %v1577, %v1576
      %v1604 = vpack.c.bf16 %v1579, %v1578
      %v1605 = vlaneseq
      %v1606 = vshrl.u32 %v1605, 7
      %v1607 = vsub.s32 0, %v1606
      %v1608 = vrot.slane %v1588, %v1607
      %v1617 = vunpack.c.l.b16 %v1580
      %v1618 = vunpack.c.l.b16 %v1581
      %v1619 = vunpack.c.l.b16 %v1582
      %v1620 = vunpack.c.l.b16 %v1583
      %v1621 = vunpack.c.l.b16 %v1584
      %v1622 = vunpack.c.l.b16 %v1585
      %v1623 = vunpack.c.l.b16 %v1586
      %v1624 = vunpack.c.l.b16 %v1587
      %v1625 = vpack.c.b16 %v1618, %v1617
      %v1626 = vpack.c.b16 %v1620, %v1619
      %v1627 = vpack.c.b16 %v1622, %v1621
      %v1628 = vpack.c.b16 %v1624, %v1623
      %v1634 = vsel %vm684, %v1589, 0
      %v1637 = vsel %vm684, %v1590, 0
      %v1640 = vsel %vm684, %v1591, 0
      %v1643 = vsel %vm684, %v1592, 0
      %v1646 = vsel %vm684, %v1593, 0
      %v1649 = vsel %vm684, %v1594, 0
      %v1652 = vsel %vm684, %v1595, 0
      %v1655 = vsel %vm684, %v1596, 0
      %v1658 = vsel %vm684, %v1597, 0
      %v1661 = vsel %vm684, %v1598, 0
      %v1664 = vsel %vm684, %v1599, 0
      %v1667 = vsel %vm684, %v1600, 0
      %v1670 = vsel %vm684, %v1601, 0
      %v1673 = vsel %vm684, %v1602, 0
      %v1676 = vsel %vm684, %v1603, 0
      %v1679 = vsel %vm684, %v1604, 0
      %1681 = vmatprep.subr.bf16.mxu0 0
      %1682 = vmatpush1.bf16.msra.mxu0 0
      %1683 = vmatprep.subr.bf16.mxu0 0
      %1684 = vmatpush1.bf16.msra.mxu0 0
      %1685 = vmatprep.subr.bf16.mxu0 0
      %1686 = vmatpush1.bf16.msra.mxu0 0
      %1687 = vmatprep.subr.bf16.mxu0 0
      %1688 = vmatpush1.bf16.msra.mxu0 0
      %1689 = vmatprep.subr.bf16.mxu0 0
      %1690 = vmatpush1.bf16.msra.mxu0 %v1628
      %1691 = vmatprep.subr.bf16.mxu0 0
      %1692 = vmatpush1.bf16.msra.mxu0 %v1627
      %1693 = vmatprep.subr.bf16.mxu0 0
      %1694 = vmatpush1.bf16.msra.mxu0 %v1626
      %1695 = vmatprep.subr.bf16.mxu0 0
      %1696 = vmatpush1.bf16.msra.mxu0 %v1625
      %1697 = vmatprep.subr.bf16.mxu0 0
      %1698 = vmatpush2.bf16.msra.mxu0 0
      %1699 = vmatprep.subr.bf16.mxu0 0
      %1700 = vmatpush2.bf16.msra.mxu0 0
      %1701 = vmatprep.subr.bf16.mxu0 0
      %1702 = vmatpush2.bf16.msra.mxu0 0
      %1703 = vmatprep.subr.bf16.mxu0 0
      %1704 = vmatpush2.bf16.msra.mxu0 0
      %1705 = vmatprep.subr.bf16.mxu0 0
      %1706 = vmatpush2.bf16.msra.mxu0 0
      %1707 = vmatprep.subr.bf16.mxu0 0
      %1708 = vmatpush2.bf16.msra.mxu0 0
      %1709 = vmatprep.subr.bf16.mxu0 0
      %1710 = vmatpush2.bf16.msra.mxu0 0
      %1711 = vmatprep.subr.bf16.mxu0 0
      %1712 = vmatpush2.bf16.msra.mxu0 0
      %1713 = vmatprep.mubr.bf16.mxu0 0
      %1714 = vmatmul.mubr.bf16.gmra.mxu0 %v1634
      %v1715 = vpop.f32.mrf.mxu0
      %v1716 = vadd.f32 %v1608, %v1715
      %v1717 = vpop.f32.mrf.mxu0
      %v1718 = vpop.f32.mrf.mxu0
      %v1719 = vadd.f32 %v1608, %v1718
      %v1720 = vpop.f32.mrf.mxu0
      %1721 = vmatprep.mubr.bf16.mxu0 0
      %1722 = vmatmul.mubr.bf16.gmra.mxu0 %v1637
      %v1723 = vpop.f32.mrf.mxu0
      %v1724 = vadd.f32 %v1608, %v1723
      %v1725 = vpop.f32.mrf.mxu0
      %v1726 = vpop.f32.mrf.mxu0
      %v1727 = vadd.f32 %v1608, %v1726
      %v1728 = vpop.f32.mrf.mxu0
      %1729 = vmatprep.mubr.bf16.mxu0 0
      %1730 = vmatmul.mubr.bf16.gmra.mxu0 %v1640
      %v1731 = vpop.f32.mrf.mxu0
      %v1732 = vadd.f32 %v1608, %v1731
      %v1733 = vpop.f32.mrf.mxu0
      %v1734 = vpop.f32.mrf.mxu0
      %v1735 = vadd.f32 %v1608, %v1734
      %v1736 = vpop.f32.mrf.mxu0
      %1737 = vmatprep.mubr.bf16.mxu0 0
      %1738 = vmatmul.mubr.bf16.gmra.mxu0 %v1643
      %v1739 = vpop.f32.mrf.mxu0
      %v1740 = vadd.f32 %v1608, %v1739
      %v1741 = vpop.f32.mrf.mxu0
      %v1742 = vpop.f32.mrf.mxu0
      %v1743 = vadd.f32 %v1608, %v1742
      %v1744 = vpop.f32.mrf.mxu0
      %1745 = vmatprep.mubr.bf16.mxu0 0
      %1746 = vmatmul.mubr.bf16.gmra.mxu0 %v1646
      %v1747 = vpop.f32.mrf.mxu0
      %v1748 = vadd.f32 %v1608, %v1747
      %v1749 = vpop.f32.mrf.mxu0
      %v1750 = vpop.f32.mrf.mxu0
      %v1751 = vadd.f32 %v1608, %v1750
      %v1752 = vpop.f32.mrf.mxu0
      %1753 = vmatprep.mubr.bf16.mxu0 0
      %1754 = vmatmul.mubr.bf16.gmra.mxu0 %v1649
      %v1755 = vpop.f32.mrf.mxu0
      %v1756 = vadd.f32 %v1608, %v1755
      %v1757 = vpop.f32.mrf.mxu0
      %v1758 = vpop.f32.mrf.mxu0
      %v1759 = vadd.f32 %v1608, %v1758
      %v1760 = vpop.f32.mrf.mxu0
      %1761 = vmatprep.mubr.bf16.mxu0 0
      %1762 = vmatmul.mubr.bf16.gmra.mxu0 %v1652
      %v1763 = vpop.f32.mrf.mxu0
      %v1764 = vadd.f32 %v1608, %v1763
      %v1765 = vpop.f32.mrf.mxu0
      %v1766 = vpop.f32.mrf.mxu0
      %v1767 = vadd.f32 %v1608, %v1766
      %v1768 = vpop.f32.mrf.mxu0
      %1769 = vmatprep.mubr.bf16.mxu0 0
      %1770 = vmatmul.mubr.bf16.gmra.mxu0 %v1655
      %v1771 = vpop.f32.mrf.mxu0
      %v1772 = vadd.f32 %v1608, %v1771
      %v1773 = vpop.f32.mrf.mxu0
      %v1774 = vpop.f32.mrf.mxu0
      %v1775 = vadd.f32 %v1608, %v1774
      %v1776 = vpop.f32.mrf.mxu0
      %1777 = vmatprep.mubr.bf16.mxu0 0
      %1778 = vmatmul.mubr.bf16.gmra.mxu0 %v1658
      %v1779 = vpop.f32.mrf.mxu0
      %v1780 = vadd.f32 %v1608, %v1779
      %v1781 = vpop.f32.mrf.mxu0
      %v1782 = vpop.f32.mrf.mxu0
      %v1783 = vadd.f32 %v1608, %v1782
      %v1784 = vpop.f32.mrf.mxu0
      %1785 = vmatprep.mubr.bf16.mxu0 0
      %1786 = vmatmul.mubr.bf16.gmra.mxu0 %v1661
      %v1787 = vpop.f32.mrf.mxu0
      %v1788 = vadd.f32 %v1608, %v1787
      %v1789 = vpop.f32.mrf.mxu0
      %v1790 = vpop.f32.mrf.mxu0
      %v1791 = vadd.f32 %v1608, %v1790
      %v1792 = vpop.f32.mrf.mxu0
      %1793 = vmatprep.mubr.bf16.mxu0 0
      %1794 = vmatmul.mubr.bf16.gmra.mxu0 %v1664
      %v1795 = vpop.f32.mrf.mxu0
      %v1796 = vadd.f32 %v1608, %v1795
      %v1797 = vpop.f32.mrf.mxu0
      %v1798 = vpop.f32.mrf.mxu0
      %v1799 = vadd.f32 %v1608, %v1798
      %v1800 = vpop.f32.mrf.mxu0
      %1801 = vmatprep.mubr.bf16.mxu0 0
      %1802 = vmatmul.mubr.bf16.gmra.mxu0 %v1667
      %v1803 = vpop.f32.mrf.mxu0
      %v1804 = vadd.f32 %v1608, %v1803
      %v1805 = vpop.f32.mrf.mxu0
      %v1806 = vpop.f32.mrf.mxu0
      %v1807 = vadd.f32 %v1608, %v1806
      %v1808 = vpop.f32.mrf.mxu0
      %1809 = vmatprep.mubr.bf16.mxu0 0
      %1810 = vmatmul.mubr.bf16.gmra.mxu0 %v1670
      %v1811 = vpop.f32.mrf.mxu0
      %v1812 = vadd.f32 %v1608, %v1811
      %v1813 = vpop.f32.mrf.mxu0
      %v1814 = vpop.f32.mrf.mxu0
      %v1815 = vadd.f32 %v1608, %v1814
      %v1816 = vpop.f32.mrf.mxu0
      %1817 = vmatprep.mubr.bf16.mxu0 0
      %1818 = vmatmul.mubr.bf16.gmra.mxu0 %v1673
      %v1819 = vpop.f32.mrf.mxu0
      %v1820 = vadd.f32 %v1608, %v1819
      %v1821 = vpop.f32.mrf.mxu0
      %v1822 = vpop.f32.mrf.mxu0
      %v1823 = vadd.f32 %v1608, %v1822
      %v1824 = vpop.f32.mrf.mxu0
      %1825 = vmatprep.mubr.bf16.mxu0 0
      %1826 = vmatmul.mubr.bf16.gmra.mxu0 %v1676
      %v1827 = vpop.f32.mrf.mxu0
      %v1828 = vadd.f32 %v1608, %v1827
      %v1829 = vpop.f32.mrf.mxu0
      %v1830 = vpop.f32.mrf.mxu0
      %v1831 = vadd.f32 %v1608, %v1830
      %v1832 = vpop.f32.mrf.mxu0
      %1833 = vmatprep.mubr.bf16.mxu0 0
      %1834 = vmatmul.mubr.bf16.gmra.mxu0 %v1679
      %v1835 = vpop.f32.mrf.mxu0
      %v1836 = vadd.f32 %v1608, %v1835
      %v1837 = vpop.f32.mrf.mxu0
      %v1838 = vpop.f32.mrf.mxu0
      %v1839 = vadd.f32 %v1608, %v1838
      %v1840 = vpop.f32.mrf.mxu0
      %1841 = vdwg.mxu0
      %v1842 = vmax.f32 %v1716, 0.0
      %v1843 = vmax.f32 %v1719, 0.0
      %v1844 = vmax.f32 %v1724, 0.0
      %v1845 = vmax.f32 %v1727, 0.0
      %v1846 = vmax.f32 %v1732, 0.0
      %v1847 = vmax.f32 %v1735, 0.0
      %v1848 = vmax.f32 %v1740, 0.0
      %v1849 = vmax.f32 %v1743, 0.0
      %v1850 = vmax.f32 %v1748, 0.0
      %v1851 = vmax.f32 %v1751, 0.0
      %v1852 = vmax.f32 %v1756, 0.0
      %v1853 = vmax.f32 %v1759, 0.0
      %v1854 = vmax.f32 %v1764, 0.0
      %v1855 = vmax.f32 %v1767, 0.0
      %v1856 = vmax.f32 %v1772, 0.0
      %v1857 = vmax.f32 %v1775, 0.0
      %v1858 = vmax.f32 %v1780, 0.0
      %v1859 = vmax.f32 %v1783, 0.0
      %v1860 = vmax.f32 %v1788, 0.0
      %v1861 = vmax.f32 %v1791, 0.0
      %v1862 = vmax.f32 %v1796, 0.0
      %v1863 = vmax.f32 %v1799, 0.0
      %v1864 = vmax.f32 %v1804, 0.0
      %v1865 = vmax.f32 %v1807, 0.0
      %v1866 = vmax.f32 %v1812, 0.0
      %v1867 = vmax.f32 %v1815, 0.0
      %v1868 = vmax.f32 %v1820, 0.0
      %v1869 = vmax.f32 %v1823, 0.0
      %v1870 = vmax.f32 %v1828, 0.0
      %v1871 = vmax.f32 %v1831, 0.0
      %v1872 = vmax.f32 %v1836, 0.0
      %v1873 = vmax.f32 %v1839, 0.0
      %v1874 = vpack.c.bf16 %v1843, %v1842
      %v1875 = vpack.c.bf16 %v1845, %v1844
      %v1876 = vpack.c.bf16 %v1847, %v1846
      %v1877 = vpack.c.bf16 %v1849, %v1848
      %v1878 = vpack.c.bf16 %v1851, %v1850
      %v1879 = vpack.c.bf16 %v1853, %v1852
      %v1880 = vpack.c.bf16 %v1855, %v1854
      %v1881 = vpack.c.bf16 %v1857, %v1856
      %v1882 = vpack.c.bf16 %v1859, %v1858
      %v1883 = vpack.c.bf16 %v1861, %v1860
      %v1884 = vpack.c.bf16 %v1863, %v1862
      %v1885 = vpack.c.bf16 %v1865, %v1864
      %v1886 = vpack.c.bf16 %v1867, %v1866
      %v1887 = vpack.c.bf16 %v1869, %v1868
      %v1888 = vpack.c.bf16 %v1871, %v1870
      %v1889 = vpack.c.bf16 %v1873, %v1872
      %v1890 = vld [vmem:[%s4] sm:$0xf]
      %v1891 = vld [vmem:[%s4 + $0x4] sm:$0xf]
      %v1892 = vld [vmem:[%s4 + $0x8] sm:$0xf]
      %v1893 = vld [vmem:[%s4 + $0xc] sm:$0xf]
      %v1894 = vld [vmem:[%s5 + $0x5] sm:$0x1]
      %v1895 = vlaneseq
      %v1896 = vshrl.u32 %v1895, 7
      %v1897 = vsub.s32 0, %v1896
      %v1898 = vrot.slane %v1894, %v1897
      %v1903 = vunpack.c.l.b16 %v1890
      %v1904 = vunpack.c.l.b16 %v1891
      %v1905 = vunpack.c.l.b16 %v1892
      %v1906 = vunpack.c.l.b16 %v1893
      %v1907 = vpack.c.b16 %v1904, %v1903
      %v1908 = vpack.c.b16 %v1906, %v1905
      %v1912 = vsel %vm389, %v1874, 0
      %v1915 = vsel %vm389, %v1875, 0
      %v1918 = vsel %vm389, %v1876, 0
      %v1921 = vsel %vm389, %v1877, 0
      %v1924 = vsel %vm389, %v1878, 0
      %v1927 = vsel %vm389, %v1879, 0
      %v1930 = vsel %vm389, %v1880, 0
      %v1933 = vsel %vm389, %v1881, 0
      %v1936 = vsel %vm389, %v1882, 0
      %v1939 = vsel %vm389, %v1883, 0
      %v1942 = vsel %vm389, %v1884, 0
      %v1945 = vsel %vm389, %v1885, 0
      %v1948 = vsel %vm389, %v1886, 0
      %v1951 = vsel %vm389, %v1887, 0
      %v1954 = vsel %vm389, %v1888, 0
      %v1957 = vsel %vm389, %v1889, 0
      %1959 = vmatprep.subr.bf16.mxu0 0
      %1960 = vmatpush1.bf16.msra.mxu0 0
      %1961 = vmatprep.subr.bf16.mxu0 0
      %1962 = vmatpush1.bf16.msra.mxu0 0
      %1963 = vmatprep.subr.bf16.mxu0 0
      %1964 = vmatpush1.bf16.msra.mxu0 0
      %1965 = vmatprep.subr.bf16.mxu0 0
      %1966 = vmatpush1.bf16.msra.mxu0 0
      %1967 = vmatprep.subr.bf16.mxu0 0
      %1968 = vmatpush1.bf16.msra.mxu0 0
      %1969 = vmatprep.subr.bf16.mxu0 0
      %1970 = vmatpush1.bf16.msra.mxu0 0
      %1971 = vmatprep.subr.bf16.mxu0 0
      %1972 = vmatpush1.bf16.msra.mxu0 %v1908
      %1973 = vmatprep.subr.bf16.mxu0 0
      %1974 = vmatpush1.bf16.msra.mxu0 %v1907
      %1975 = vmatprep.subr.bf16.mxu0 0
      %1976 = vmatpush2.bf16.msra.mxu0 0
      %1977 = vmatprep.subr.bf16.mxu0 0
      %1978 = vmatpush2.bf16.msra.mxu0 0
      %1979 = vmatprep.subr.bf16.mxu0 0
      %1980 = vmatpush2.bf16.msra.mxu0 0
      %1981 = vmatprep.subr.bf16.mxu0 0
      %1982 = vmatpush2.bf16.msra.mxu0 0
      %1983 = vmatprep.subr.bf16.mxu0 0
      %1984 = vmatpush2.bf16.msra.mxu0 0
      %1985 = vmatprep.subr.bf16.mxu0 0
      %1986 = vmatpush2.bf16.msra.mxu0 0
      %1987 = vmatprep.subr.bf16.mxu0 0
      %1988 = vmatpush2.bf16.msra.mxu0 0
      %1989 = vmatprep.subr.bf16.mxu0 0
      %1990 = vmatpush2.bf16.msra.mxu0 0
      %1991 = vmatprep.mubr.bf16.mxu0 0
      %1992 = vmatmul.mubr.bf16.gmra.mxu0 %v1912
      %v1993 = vpop.f32.mrf.mxu0
      %v1994 = vadd.f32 %v1898, %v1993
      %v1995 = vpop.f32.mrf.mxu0
      %v1996 = vpop.f32.mrf.mxu0
      %v1997 = vadd.f32 %v1898, %v1996
      %v1998 = vpop.f32.mrf.mxu0
      %1999 = vmatprep.mubr.bf16.mxu0 0
      %2000 = vmatmul.mubr.bf16.gmra.mxu0 %v1915
      %v2001 = vpop.f32.mrf.mxu0
      %v2002 = vadd.f32 %v1898, %v2001
      %v2003 = vpop.f32.mrf.mxu0
      %v2004 = vpop.f32.mrf.mxu0
      %v2005 = vadd.f32 %v1898, %v2004
      %v2006 = vpop.f32.mrf.mxu0
      %2007 = vmatprep.mubr.bf16.mxu0 0
      %2008 = vmatmul.mubr.bf16.gmra.mxu0 %v1918
      %v2009 = vpop.f32.mrf.mxu0
      %v2010 = vadd.f32 %v1898, %v2009
      %v2011 = vpop.f32.mrf.mxu0
      %v2012 = vpop.f32.mrf.mxu0
      %v2013 = vadd.f32 %v1898, %v2012
      %v2014 = vpop.f32.mrf.mxu0
      %2015 = vmatprep.mubr.bf16.mxu0 0
      %2016 = vmatmul.mubr.bf16.gmra.mxu0 %v1921
      %v2017 = vpop.f32.mrf.mxu0
      %v2018 = vadd.f32 %v1898, %v2017
      %v2019 = vpop.f32.mrf.mxu0
      %v2020 = vpop.f32.mrf.mxu0
      %v2021 = vadd.f32 %v1898, %v2020
      %v2022 = vpop.f32.mrf.mxu0
      %2023 = vmatprep.mubr.bf16.mxu0 0
      %2024 = vmatmul.mubr.bf16.gmra.mxu0 %v1924
      %v2025 = vpop.f32.mrf.mxu0
      %v2026 = vadd.f32 %v1898, %v2025
      %v2027 = vpop.f32.mrf.mxu0
      %v2028 = vpop.f32.mrf.mxu0
      %v2029 = vadd.f32 %v1898, %v2028
      %v2030 = vpop.f32.mrf.mxu0
      %2031 = vmatprep.mubr.bf16.mxu0 0
      %2032 = vmatmul.mubr.bf16.gmra.mxu0 %v1927
      %v2033 = vpop.f32.mrf.mxu0
      %v2034 = vadd.f32 %v1898, %v2033
      %v2035 = vpop.f32.mrf.mxu0
      %v2036 = vpop.f32.mrf.mxu0
      %v2037 = vadd.f32 %v1898, %v2036
      %v2038 = vpop.f32.mrf.mxu0
      %2039 = vmatprep.mubr.bf16.mxu0 0
      %2040 = vmatmul.mubr.bf16.gmra.mxu0 %v1930
      %v2041 = vpop.f32.mrf.mxu0
      %v2042 = vadd.f32 %v1898, %v2041
      %v2043 = vpop.f32.mrf.mxu0
      %v2044 = vpop.f32.mrf.mxu0
      %v2045 = vadd.f32 %v1898, %v2044
      %v2046 = vpop.f32.mrf.mxu0
      %2047 = vmatprep.mubr.bf16.mxu0 0
      %2048 = vmatmul.mubr.bf16.gmra.mxu0 %v1933
      %v2049 = vpop.f32.mrf.mxu0
      %v2050 = vadd.f32 %v1898, %v2049
      %v2051 = vpop.f32.mrf.mxu0
      %v2052 = vpop.f32.mrf.mxu0
      %v2053 = vadd.f32 %v1898, %v2052
      %v2054 = vpop.f32.mrf.mxu0
      %2055 = vmatprep.mubr.bf16.mxu0 0
      %2056 = vmatmul.mubr.bf16.gmra.mxu0 %v1936
      %v2057 = vpop.f32.mrf.mxu0
      %v2058 = vadd.f32 %v1898, %v2057
      %v2059 = vpop.f32.mrf.mxu0
      %v2060 = vpop.f32.mrf.mxu0
      %v2061 = vadd.f32 %v1898, %v2060
      %v2062 = vpop.f32.mrf.mxu0
      %2063 = vmatprep.mubr.bf16.mxu0 0
      %2064 = vmatmul.mubr.bf16.gmra.mxu0 %v1939
      %v2065 = vpop.f32.mrf.mxu0
      %v2066 = vadd.f32 %v1898, %v2065
      %v2067 = vpop.f32.mrf.mxu0
      %v2068 = vpop.f32.mrf.mxu0
      %v2069 = vadd.f32 %v1898, %v2068
      %v2070 = vpop.f32.mrf.mxu0
      %2071 = vmatprep.mubr.bf16.mxu0 0
      %2072 = vmatmul.mubr.bf16.gmra.mxu0 %v1942
      %v2073 = vpop.f32.mrf.mxu0
      %v2074 = vadd.f32 %v1898, %v2073
      %v2075 = vpop.f32.mrf.mxu0
      %v2076 = vpop.f32.mrf.mxu0
      %v2077 = vadd.f32 %v1898, %v2076
      %v2078 = vpop.f32.mrf.mxu0
      %2079 = vmatprep.mubr.bf16.mxu0 0
      %2080 = vmatmul.mubr.bf16.gmra.mxu0 %v1945
      %v2081 = vpop.f32.mrf.mxu0
      %v2082 = vadd.f32 %v1898, %v2081
      %v2083 = vpop.f32.mrf.mxu0
      %v2084 = vpop.f32.mrf.mxu0
      %v2085 = vadd.f32 %v1898, %v2084
      %v2086 = vpop.f32.mrf.mxu0
      %2087 = vmatprep.mubr.bf16.mxu0 0
      %2088 = vmatmul.mubr.bf16.gmra.mxu0 %v1948
      %v2089 = vpop.f32.mrf.mxu0
      %v2090 = vadd.f32 %v1898, %v2089
      %v2091 = vpop.f32.mrf.mxu0
      %v2092 = vpop.f32.mrf.mxu0
      %v2093 = vadd.f32 %v1898, %v2092
      %v2094 = vpop.f32.mrf.mxu0
      %2095 = vmatprep.mubr.bf16.mxu0 0
      %2096 = vmatmul.mubr.bf16.gmra.mxu0 %v1951
      %v2097 = vpop.f32.mrf.mxu0
      %v2098 = vadd.f32 %v1898, %v2097
      %v2099 = vpop.f32.mrf.mxu0
      %v2100 = vpop.f32.mrf.mxu0
      %v2101 = vadd.f32 %v1898, %v2100
      %v2102 = vpop.f32.mrf.mxu0
      %2103 = vmatprep.mubr.bf16.mxu0 0
      %2104 = vmatmul.mubr.bf16.gmra.mxu0 %v1954
      %v2105 = vpop.f32.mrf.mxu0
      %v2106 = vadd.f32 %v1898, %v2105
      %v2107 = vpop.f32.mrf.mxu0
      %v2108 = vpop.f32.mrf.mxu0
      %v2109 = vadd.f32 %v1898, %v2108
      %v2110 = vpop.f32.mrf.mxu0
      %2111 = vmatprep.mubr.bf16.mxu0 0
      %2112 = vmatmul.mubr.bf16.gmra.mxu0 %v1957
      %v2113 = vpop.f32.mrf.mxu0
      %v2114 = vadd.f32 %v1898, %v2113
      %v2115 = vpop.f32.mrf.mxu0
      %v2116 = vpop.f32.mrf.mxu0
      %v2117 = vadd.f32 %v1898, %v2116
      %v2118 = vpop.f32.mrf.mxu0
      %2119 = vdwg.mxu0
      %vm2120 = vcmask 64512
      %2121 = vst.msk [vmem:[%s253] sm:$0xff] %vm2120, %v1994
      %2122 = vst.msk [vmem:[%s253 + $0x8] sm:$0xff] %vm2120, %v1997
      %2123 = vst.msk [vmem:[%s253 + $0x10] sm:$0xff] %vm2120, %v2002
      %2124 = vst.msk [vmem:[%s253 + $0x18] sm:$0xff] %vm2120, %v2005
      %2125 = vst.msk [vmem:[%s253 + $0x20] sm:$0xff] %vm2120, %v2010
      %2126 = vst.msk [vmem:[%s253 + $0x28] sm:$0xff] %vm2120, %v2013
      %2127 = vst.msk [vmem:[%s253 + $0x30] sm:$0xff] %vm2120, %v2018
      %2128 = vst.msk [vmem:[%s253 + $0x38] sm:$0xff] %vm2120, %v2021
      %2129 = vst.msk [vmem:[%s253 + $0x40] sm:$0xff] %vm2120, %v2026
      %2130 = vst.msk [vmem:[%s253 + $0x48] sm:$0xff] %vm2120, %v2029
      %2131 = vst.msk [vmem:[%s253 + $0x50] sm:$0xff] %vm2120, %v2034
      %2132 = vst.msk [vmem:[%s253 + $0x58] sm:$0xff] %vm2120, %v2037
      %2133 = vst.msk [vmem:[%s253 + $0x60] sm:$0xff] %vm2120, %v2042
      %2134 = vst.msk [vmem:[%s253 + $0x68] sm:$0xff] %vm2120, %v2045
      %2135 = vst.msk [vmem:[%s253 + $0x70] sm:$0xff] %vm2120, %v2050
      %2136 = vst.msk [vmem:[%s253 + $0x78] sm:$0xff] %vm2120, %v2053
      %2137 = vst.msk [vmem:[%s253 + $0x80] sm:$0xff] %vm2120, %v2058
      %2138 = vst.msk [vmem:[%s253 + $0x88] sm:$0xff] %vm2120, %v2061
      %2139 = vst.msk [vmem:[%s253 + $0x90] sm:$0xff] %vm2120, %v2066
      %2140 = vst.msk [vmem:[%s253 + $0x98] sm:$0xff] %vm2120, %v2069
      %2141 = vst.msk [vmem:[%s253 + $0xa0] sm:$0xff] %vm2120, %v2074
      %2142 = vst.msk [vmem:[%s253 + $0xa8] sm:$0xff] %vm2120, %v2077
      %2143 = vst.msk [vmem:[%s253 + $0xb0] sm:$0xff] %vm2120, %v2082
      %2144 = vst.msk [vmem:[%s253 + $0xb8] sm:$0xff] %vm2120, %v2085
      %2145 = vst.msk [vmem:[%s253 + $0xc0] sm:$0xff] %vm2120, %v2090
      %2146 = vst.msk [vmem:[%s253 + $0xc8] sm:$0xff] %vm2120, %v2093
      %2147 = vst.msk [vmem:[%s253 + $0xd0] sm:$0xff] %vm2120, %v2098
      %2148 = vst.msk [vmem:[%s253 + $0xd8] sm:$0xff] %vm2120, %v2101
      %2149 = vst.msk [vmem:[%s253 + $0xe0] sm:$0xff] %vm2120, %v2106
      %2150 = vst.msk [vmem:[%s253 + $0xe8] sm:$0xff] %vm2120, %v2109
      %2151 = vst.msk [vmem:[%s253 + $0xf0] sm:$0xff] %vm2120, %v2114
      %2152 = vst.msk [vmem:[%s253 + $0xf8] sm:$0xff] %vm2120, %v2117
      %s2153 = smul.u32 32, %s17
      %p2154 = scmp.lt.s32.totalorder %s2153, 63
      %s2155 = scalar_select %p2154, %s2153, 63
      %s2156 = smul.addr %s2155, 8
      %s2157 = scalar_lea.vmem %s6, %s2156
      // Predicated region
      $region45: #{_fc_model_forward.1} parent=43 // pred_check
        %p2158 = pneg %p166
      $region46: #{_fc_model_forward.1} parent=43 // pred_check_branch
        %2160 = sbr.rel (%p2158) target = $region48
      $region47: #{_fc_model_forward.1} parent=43 // pred_region
        %s2161 = smul.u32 32, %s17
      $region48: #{_fc_model_forward.1} parent=43 // pred_fallthru
        _
    $region44: #{_fc_model_forward.1} parent=5 // pred_fallthru
      _
    %p2162 = scmp.le.s32.totalorder 2, %s12
    // Predicated region
    $region49: #{_fc_model_forward.1} parent=5 // pred_check
      %p2163 = pneg %p2162
    $region50: #{_fc_model_forward.1} parent=5 // pred_check_branch
      %2165 = sbr.rel (%p2163) target = $region52
    $region51: #{_fc_model_forward.1} parent=5 // pred_region
      %s2166 = ssub.s32 %s12, 2
      // Predicated region
      $region53: #{_fc_model_forward.1} parent=51 // pred_check
        %p2167 = pneg %p172
      $region54: #{_fc_model_forward.1} parent=51 // pred_check_branch
        %2169 = sbr.rel (%p2167) target = $region56
      $region55: #{_fc_model_forward.1} parent=51 // pred_region
        %s2170 = smul.u32 32, %s18
        %p2171 = scmp.lt.s32.totalorder %s2170, 63
        %s2172 = scalar_select %p2171, %s2170, 63
        %s2173 = smul.addr %s2172, 8
        %s2174 = scalar_lea.vmem %s6, %s2173
      $region56: #{_fc_model_forward.1} parent=51 // pred_fallthru
        _
    $region52: #{_fc_model_forward.1} parent=5 // pred_fallthru
      _
  $region6: #{_fc_model_forward.1} parent=0 // loop_footer
    %s16 = sadd.s32 1, %s12
  $region7: #{_fc_model_forward.1} parent=0 // loop_footer_branch
    %11 = sbr.rel target = $region3
  $region8: #{_fc_model_forward.1} parent=0 // loop_exit
    _

</llo_original>
